<compile_context>
chip_gen: v7x
topology: tpu7x:2x2x1
jax: 0.10.0
libtpu: 0.0.40
codegen_flags: <defaults>
</compile_context>

<pallas_src>
import jax
import jax.numpy as jnp
from jax.experimental import pallas as pl
from jax.experimental.pallas import tpu as pltpu

PADL = 128  # lane-aligned left pad inside the conv scratch buffers


def basic_block_kernel(x_ref, w1_ref, t1_ref, w2_ref, t2_ref, wd_ref, td_ref,
                       sew1_ref, seb1_ref, sew2_ref, seb2_ref,
                       o_ref, pad1_ref, pad2_ref):
    L = x_ref.shape[2]
    x = x_ref[0]                                        # (Cin, L) bf16

    def conv3(inp, pad_ref, w_ref):
        # k=3 / pad=1 conv as ONE MXU matmul: zero-pad `inp` along L inside a
        # VMEM scratch (aligned store at lane offset PADL), read the three taps
        # as statically shifted slices and stack them along the contraction
        # axis (rows ordered [x(l-1); x(l); x(l+1)] to match the tap-major
        # weight layout prepared in the wrapper).
        pad_ref[...] = jnp.zeros(pad_ref.shape, pad_ref.dtype)
        pad_ref[:, PADL:PADL + L] = inp
        taps = jnp.concatenate(
            [pad_ref[:, PADL - 1:PADL - 1 + L],         # x[l-1]  (0 at l = 0)
             pad_ref[:, PADL:PADL + L],                 # x[l]
             pad_ref[:, PADL + 1:PADL + 1 + L]],        # x[l+1]  (0 at l = L-1)
            axis=0)                                     # (3*C, L) bf16
        return jnp.dot(w_ref[...], taps, preferred_element_type=jnp.float32)

    # conv1 -> folded bn1 shift -> ReLU
    h = conv3(x, pad1_ref, w1_ref)
    h = jnp.maximum(h + t1_ref[...], 0.0)               # (Cout, L) f32

    # conv2 -> folded bn2 shift
    h = conv3(h.astype(pad2_ref.dtype), pad2_ref, w2_ref)
    h = h + t2_ref[...]

    # SE block: global mean over L, tiny MLP gate kept on the VPU
    # (broadcast-multiply + cross-sublane / cross-lane reductions; no M=1 MXU
    #  matmuls sitting on the serial mean -> gate -> scale dependency).
    y = jnp.mean(h, axis=1, keepdims=True)                                  # (Cout, 1)
    g = jnp.sum(sew1_ref[...] * y, axis=0, keepdims=True) + seb1_ref[...]   # (1, H)
    g = jnp.maximum(g, 0.0)
    g = jnp.sum(sew2_ref[...] * g, axis=1, keepdims=True) + seb2_ref[...]   # (Cout, 1)
    h = h * jax.nn.sigmoid(g)

    # downsample identity (1x1 conv, folded BN) + residual add + final ReLU
    ident = jnp.dot(wd_ref[...], x, preferred_element_type=jnp.float32) + td_ref[...]
    o_ref[0] = jnp.maximum(h + ident, 0.0)


def basic_block_1d(x, p, eps=1e-5):
    """x: (B, Cin, L) float32 in PyTorch NCL layout. Returns (B, Cout, L) float32."""
    B, Cin, L = x.shape
    Cout, _, K = p["conv1_w"].shape
    H = p["se_w1"].shape[0]

    def fold_conv(w, b, g, beta, m, v):
        # Fold the BN scale into the conv weight; keep only the additive shift.
        s = g / jnp.sqrt(v + eps)                                   # (Cout,)
        w_f = w * s[:, None, None]                                  # (Cout, Ci, K)
        # Tap-major contraction layout: columns ordered [k=0 | k=1 | k=2], each
        # a block of Ci channels, matching the [x(l-1); x(l); x(l+1)] stacking.
        w_cat = jnp.transpose(w_f, (0, 2, 1)).reshape(w.shape[0], -1)
        t = ((b - m) * s + beta)[:, None]                           # (Cout, 1)
        return w_cat.astype(jnp.bfloat16), t.astype(jnp.float32)

    w1c, t1 = fold_conv(p["conv1_w"], p["conv1_b"],
                        p["bn1_g"], p["bn1_b"], p["bn1_m"], p["bn1_v"])
    w2c, t2 = fold_conv(p["conv2_w"], p["conv2_b"],
                        p["bn2_g"], p["bn2_b"], p["bn2_m"], p["bn2_v"])

    sdn = p["bnd_g"] / jnp.sqrt(p["bnd_v"] + eps)
    wd = (p["down_w"][:, :, 0] * sdn[:, None]).astype(jnp.bfloat16)          # (Cout, Cin)
    td = (((p["down_b"] - p["bnd_m"]) * sdn + p["bnd_b"])[:, None]).astype(jnp.float32)

    sew1 = jnp.transpose(p["se_w1"], (1, 0))        # (Cout, H)  (contraction over sublanes)
    seb1 = p["se_b1"][None, :]                      # (1, H)
    sew2 = p["se_w2"]                               # (Cout, H)  native layout
    seb2 = p["se_b2"][:, None]                      # (Cout, 1)

    x_bf = x.astype(jnp.bfloat16)                   # bf16 MXU inputs, f32 accumulation

    wspec = lambda shp: pl.BlockSpec(shp, lambda b: (0,) * len(shp))  # resident weights

    flops = (2 * B * L * (K * Cin * Cout + K * Cout * Cout + Cin * Cout)
             + 4 * B * Cout * H)
    bytes_accessed = (2 * x.size + 4 * B * Cout * L
                      + 2 * (w1c.size + w2c.size + wd.size)
                      + 4 * (3 * Cout + H + 2 * Cout * H))
    cost = pl.CostEstimate(flops=int(flops), transcendentals=int(2 * B * Cout),
                           bytes_accessed=int(bytes_accessed))

    return pl.pallas_call(
        basic_block_kernel,
        out_shape=jax.ShapeDtypeStruct((B, Cout, L), jnp.float32),
        grid=(B,),
        in_specs=[
            pl.BlockSpec((1, Cin, L), lambda b: (b, 0, 0)),     # x, streamed per batch
            wspec((Cout, K * Cin)), wspec((Cout, 1)),           # conv1 (+ folded bn1)
            wspec((Cout, K * Cout)), wspec((Cout, 1)),          # conv2 (+ folded bn2)
            wspec((Cout, Cin)), wspec((Cout, 1)),               # downsample (+ folded bnd)
            wspec((Cout, H)), wspec((1, H)),                    # SE fc1
            wspec((Cout, H)), wspec((Cout, 1)),                 # SE fc2
        ],
        out_specs=pl.BlockSpec((1, Cout, L), lambda b: (b, 0, 0)),
        scratch_shapes=[pltpu.VMEM((Cin, L + 2 * PADL), jnp.bfloat16),
                        pltpu.VMEM((Cout, L + 2 * PADL), jnp.bfloat16)],
        compiler_params=pltpu.CompilerParams(
            dimension_semantics=("parallel",)),
        cost_estimate=cost,
    )(x_bf, w1c, t1, w2c, t2, wd, td, sew1, seb1, sew2, seb2)


def basic_block_ref(x, p, eps=1e-5):
    """Pure-JAX reference of the PyTorch forward (inference-mode BatchNorm)."""
    def conv1d(x, w, b, pad):
        y = jax.lax.conv_general_dilated(
            x, w, window_strides=(1,), padding=((pad, pad),),
            dimension_numbers=("NCH", "OIH", "NCH"))
        return y + b[None, :, None]

    def bn(x, g, bta, m, v):
        return ((x - m[None, :, None]) / jnp.sqrt(v[None, :, None] + eps)
                * g[None, :, None] + bta[None, :, None])

    out = jnp.maximum(bn(conv1d(x, p["conv1_w"], p["conv1_b"], 1),
                         p["bn1_g"], p["bn1_b"], p["bn1_m"], p["bn1_v"]), 0.0)
    out = bn(conv1d(out, p["conv2_w"], p["conv2_b"], 1),
             p["bn2_g"], p["bn2_b"], p["bn2_m"], p["bn2_v"])
    # SEBlock
    y = jnp.mean(out, axis=-1)                              # (B, Cout)
    h = jnp.maximum(y @ p["se_w1"].T + p["se_b1"], 0.0)
    s = jax.nn.sigmoid(h @ p["se_w2"].T + p["se_b2"])
    out = out * s[:, :, None]
    # downsample identity
    ident = bn(conv1d(x, p["down_w"], p["down_b"], 0),
               p["bnd_g"], p["bnd_b"], p["bnd_m"], p["bnd_v"])
    return jnp.maximum(out + ident, 0.0)


def init_params(key, cin, cout, k, reduction):
    h = cout // reduction
    ks = jax.random.split(key, 24)
    u = lambda kk, shape, bound: jax.random.uniform(kk, shape, jnp.float32, -bound, bound)
    b_c1 = 1.0 / (cin * k) ** 0.5
    b_c2 = 1.0 / (cout * k) ** 0.5
    b_d = 1.0 / cin ** 0.5
    b_s1 = 1.0 / cout ** 0.5
    b_s2 = 1.0 / h ** 0.5

    def bn_params(k0, k1, k2, k3, c):
        return (jax.random.uniform(k0, (c,), jnp.float32, 0.8, 1.2),    # gamma
                jax.random.uniform(k1, (c,), jnp.float32, -0.1, 0.1),   # beta
                jax.random.uniform(k2, (c,), jnp.float32, -0.1, 0.1),   # running mean
                jax.random.uniform(k3, (c,), jnp.float32, 0.5, 1.5))    # running var

    p = {
        "conv1_w": u(ks[0], (cout, cin, k), b_c1), "conv1_b": u(ks[1], (cout,), b_c1),
        "conv2_w": u(ks[2], (cout, cout, k), b_c2), "conv2_b": u(ks[3], (cout,), b_c2),
        "down_w": u(ks[4], (cout, cin, 1), b_d), "down_b": u(ks[5], (cout,), b_d),
        "se_w1": u(ks[6], (h, cout), b_s1), "se_b1": u(ks[7], (h,), b_s1),
        "se_w2": u(ks[8], (cout, h), b_s2), "se_b2": u(ks[9], (cout,), b_s2),
    }
    p["bn1_g"], p["bn1_b"], p["bn1_m"], p["bn1_v"] = bn_params(ks[10], ks[11], ks[12], ks[13], cout)
    p["bn2_g"], p["bn2_b"], p["bn2_m"], p["bn2_v"] = bn_params(ks[14], ks[15], ks[16], ks[17], cout)
    p["bnd_g"], p["bnd_b"], p["bnd_m"], p["bnd_v"] = bn_params(ks[18], ks[19], ks[20], ks[21], cout)
    return p


if __name__ == "__main__":
    # Small shapes consistent with the module; Cout = L = 128 keeps both the
    # matmul output rows and the lane dim dense.  SE hidden = 128 // 16 = 8.
    B, CIN, COUT, L, K, RED = 2, 64, 128, 128, 3, 16

    key = jax.random.PRNGKey(0)
    kx, kp = jax.random.split(key)
    x = jax.random.normal(kx, (B, CIN, L), dtype=jnp.float32)
    params = init_params(kp, CIN, COUT, K, RED)

    fwd = jax.jit(basic_block_1d)
    out = jax.block_until_ready(fwd(x, params))

    ref = basic_block_ref(x, params)
    assert out.shape == (B, COUT, L)
    # Tolerance covers the bf16 MXU inputs (f32 accumulation) adopted per the
    # performance review, across two chained k=3 convolutions vs the f32
    # XLA reference.
    assert jnp.allclose(out, ref, atol=2e-2, rtol=2e-2), "mismatch vs reference"

    print("KERNEL_OK")
</pallas_src>

<mosaic_0001>
module attributes {stable_mosaic.version = 11 : i64} {
  func.func @basic_block_kernel(%arg0: i32, %arg1: memref<1x64x128xbf16, #tpu.memory_space<vmem>>, %arg2: memref<128x192xbf16, #tpu.memory_space<vmem>>, %arg3: memref<128x1xf32, #tpu.memory_space<vmem>>, %arg4: memref<128x384xbf16, #tpu.memory_space<vmem>>, %arg5: memref<128x1xf32, #tpu.memory_space<vmem>>, %arg6: memref<128x64xbf16, #tpu.memory_space<vmem>>, %arg7: memref<128x1xf32, #tpu.memory_space<vmem>>, %arg8: memref<128x8xf32, #tpu.memory_space<vmem>>, %arg9: memref<1x8xf32, #tpu.memory_space<vmem>>, %arg10: memref<128x8xf32, #tpu.memory_space<vmem>>, %arg11: memref<128x1xf32, #tpu.memory_space<vmem>>, %arg12: memref<1x128x128xf32, #tpu.memory_space<vmem>>, %arg13: memref<64x384xbf16, #tpu.memory_space<vmem>>, %arg14: memref<128x384xbf16, #tpu.memory_space<vmem>>) attributes {dimension_semantics = [#tpu.dimension_semantics<parallel>], iteration_bounds = array<i64: 2>, scalar_prefetch = 0 : i64, scratch_operands = 2 : i64, tpu.core_type = #tpu.core_type<tc>, window_params = [{transform_indices = @transform_0, window_bounds = array<i64: 1, 64, 128>}, {pipeline_mode = #tpu.pipeline_mode<synchronous>, transform_indices = @transform_1, window_bounds = array<i64: 128, 192>}, {pipeline_mode = #tpu.pipeline_mode<synchronous>, transform_indices = @transform_2, window_bounds = array<i64: 128, 1>}, {pipeline_mode = #tpu.pipeline_mode<synchronous>, transform_indices = @transform_3, window_bounds = array<i64: 128, 384>}, {pipeline_mode = #tpu.pipeline_mode<synchronous>, transform_indices = @transform_4, window_bounds = array<i64: 128, 1>}, {pipeline_mode = #tpu.pipeline_mode<synchronous>, transform_indices = @transform_5, window_bounds = array<i64: 128, 64>}, {pipeline_mode = #tpu.pipeline_mode<synchronous>, transform_indices = @transform_6, window_bounds = array<i64: 128, 1>}, {pipeline_mode = #tpu.pipeline_mode<synchronous>, transform_indices = @transform_7, window_bounds = array<i64: 128, 8>}, {pipeline_mode = #tpu.pipeline_mode<synchronous>, transform_indices = @transform_8, window_bounds = array<i64: 1, 8>}, {pipeline_mode = #tpu.pipeline_mode<synchronous>, transform_indices = @transform_9, window_bounds = array<i64: 128, 8>}, {pipeline_mode = #tpu.pipeline_mode<synchronous>, transform_indices = @transform_10, window_bounds = array<i64: 128, 1>}, {transform_indices = @transform_11, window_bounds = array<i64: 1, 128, 128>}]} {
    %c0 = arith.constant 0 : index
    %c0_0 = arith.constant 0 : index
    %c0_1 = arith.constant 0 : index
    %0 = vector.load %arg1[%c0, %c0_0, %c0_1] : memref<1x64x128xbf16, #tpu.memory_space<vmem>>, vector<1x64x128xbf16>
    %1 = vector.shape_cast %0 : vector<1x64x128xbf16> to vector<64x128xbf16>
    %cst = arith.constant 0.000000e+00 : bf16
    %2 = vector.broadcast %cst : bf16 to vector<64x384xbf16>
    %c0_2 = arith.constant 0 : index
    %c0_3 = arith.constant 0 : index
    %3 = vector.load %arg13[%c0_2, %c0_3] : memref<64x384xbf16, #tpu.memory_space<vmem>>, vector<64x384xbf16>
    tpu.vector_store %arg13[%c0_2, %c0_3], %2 {strides = array<i32>} : memref<64x384xbf16, #tpu.memory_space<vmem>>, vector<64x384xbf16>,
    %c0_4 = arith.constant 0 : index
    %c128 = arith.constant 128 : index
    %4 = vector.load %arg13[%c0_4, %c128] : memref<64x384xbf16, #tpu.memory_space<vmem>>, vector<64x128xbf16>
    tpu.vector_store %arg13[%c0_4, %c128], %1 {strides = array<i32>} : memref<64x384xbf16, #tpu.memory_space<vmem>>, vector<64x128xbf16>,
    %c0_5 = arith.constant 0 : index
    %c127 = arith.constant 127 : index
    %5 = vector.load %arg13[%c0_5, %c127] : memref<64x384xbf16, #tpu.memory_space<vmem>>, vector<64x128xbf16>
    %c0_6 = arith.constant 0 : index
    %c128_7 = arith.constant 128 : index
    %6 = vector.load %arg13[%c0_6, %c128_7] : memref<64x384xbf16, #tpu.memory_space<vmem>>, vector<64x128xbf16>
    %c0_8 = arith.constant 0 : index
    %c129 = arith.constant 129 : index
    %7 = vector.load %arg13[%c0_8, %c129] : memref<64x384xbf16, #tpu.memory_space<vmem>>, vector<64x128xbf16>
    %8 = tpu.concatenate %5, %6, %7 in 0 : vector<64x128xbf16>, vector<64x128xbf16>, vector<64x128xbf16> -> vector<192x128xbf16>
    %c0_9 = arith.constant 0 : index
    %c0_10 = arith.constant 0 : index
    %9 = vector.load %arg2[%c0_9, %c0_10] : memref<128x192xbf16, #tpu.memory_space<vmem>>, vector<128x192xbf16>
    %cst_11 = arith.constant dense<0.000000e+00> : vector<128x128xf32>
    %10 = tpu.matmul %9, %8, %cst_11 {dimension_numbers = #tpu.dot_dimension_numbers<[1], [0], [0], [1], [0, 0, 1, 1], [], []>} : vector<128x192xbf16>, vector<192x128xbf16>, vector<128x128xf32> -> vector<128x128xf32>
    %c0_12 = arith.constant 0 : index
    %c0_13 = arith.constant 0 : index
    %11 = vector.load %arg3[%c0_12, %c0_13] : memref<128x1xf32, #tpu.memory_space<vmem>>, vector<128x1xf32>
    %12 = vector.broadcast %11 : vector<128x1xf32> to vector<128x128xf32>
    %13 = arith.addf %10, %12 : vector<128x128xf32>
    %cst_14 = arith.constant 0.000000e+00 : f32
    %14 = vector.broadcast %cst_14 : f32 to vector<128x128xf32>
    %15 = arith.maximumf %13, %14 : vector<128x128xf32>
    %16 = arith.truncf %15 : vector<128x128xf32> to vector<128x128xbf16>
    %cst_15 = arith.constant 0.000000e+00 : bf16
    %17 = vector.broadcast %cst_15 : bf16 to vector<128x384xbf16>
    %c0_16 = arith.constant 0 : index
    %c0_17 = arith.constant 0 : index
    %18 = vector.load %arg14[%c0_16, %c0_17] : memref<128x384xbf16, #tpu.memory_space<vmem>>, vector<128x384xbf16>
    tpu.vector_store %arg14[%c0_16, %c0_17], %17 {strides = array<i32>} : memref<128x384xbf16, #tpu.memory_space<vmem>>, vector<128x384xbf16>,
    %c0_18 = arith.constant 0 : index
    %c128_19 = arith.constant 128 : index
    %19 = vector.load %arg14[%c0_18, %c128_19] : memref<128x384xbf16, #tpu.memory_space<vmem>>, vector<128x128xbf16>
    tpu.vector_store %arg14[%c0_18, %c128_19], %16 {strides = array<i32>} : memref<128x384xbf16, #tpu.memory_space<vmem>>, vector<128x128xbf16>,
    %c0_20 = arith.constant 0 : index
    %c127_21 = arith.constant 127 : index
    %20 = vector.load %arg14[%c0_20, %c127_21] : memref<128x384xbf16, #tpu.memory_space<vmem>>, vector<128x128xbf16>
    %c0_22 = arith.constant 0 : index
    %c128_23 = arith.constant 128 : index
    %21 = vector.load %arg14[%c0_22, %c128_23] : memref<128x384xbf16, #tpu.memory_space<vmem>>, vector<128x128xbf16>
    %c0_24 = arith.constant 0 : index
    %c129_25 = arith.constant 129 : index
    %22 = vector.load %arg14[%c0_24, %c129_25] : memref<128x384xbf16, #tpu.memory_space<vmem>>, vector<128x128xbf16>
    %23 = tpu.concatenate %20, %21, %22 in 0 : vector<128x128xbf16>, vector<128x128xbf16>, vector<128x128xbf16> -> vector<384x128xbf16>
    %c0_26 = arith.constant 0 : index
    %c0_27 = arith.constant 0 : index
    %24 = vector.load %arg4[%c0_26, %c0_27] : memref<128x384xbf16, #tpu.memory_space<vmem>>, vector<128x384xbf16>
    %cst_28 = arith.constant dense<0.000000e+00> : vector<128x128xf32>
    %25 = tpu.matmul %24, %23, %cst_28 {dimension_numbers = #tpu.dot_dimension_numbers<[1], [0], [0], [1], [0, 0, 1, 1], [], []>} : vector<128x384xbf16>, vector<384x128xbf16>, vector<128x128xf32> -> vector<128x128xf32>
    %c0_29 = arith.constant 0 : index
    %c0_30 = arith.constant 0 : index
    %26 = vector.load %arg5[%c0_29, %c0_30] : memref<128x1xf32, #tpu.memory_space<vmem>>, vector<128x1xf32>
    %27 = vector.broadcast %26 : vector<128x1xf32> to vector<128x128xf32>
    %28 = arith.addf %25, %27 : vector<128x128xf32>
    %cst_31 = arith.constant dense<0.000000e+00> : vector<128xf32>
    %29 = vector.multi_reduction <add>, %28, %cst_31 [1] : vector<128x128xf32> to vector<128xf32>
    %30 = vector.shape_cast %29 : vector<128xf32> to vector<128x1xf32>
    %cst_32 = arith.constant 1.280000e+02 : f32
    %31 = vector.broadcast %cst_32 : f32 to vector<128x1xf32>
    %32 = arith.divf %30, %31 : vector<128x1xf32>
    %c0_33 = arith.constant 0 : index
    %c0_34 = arith.constant 0 : index
    %33 = vector.load %arg8[%c0_33, %c0_34] : memref<128x8xf32, #tpu.memory_space<vmem>>, vector<128x8xf32>
    %34 = vector.broadcast %32 : vector<128x1xf32> to vector<128x8xf32>
    %35 = arith.mulf %33, %34 : vector<128x8xf32>
    %cst_35 = arith.constant dense<0.000000e+00> : vector<8xf32>
    %36 = vector.multi_reduction <add>, %35, %cst_35 [0] : vector<128x8xf32> to vector<8xf32>
    %37 = vector.shape_cast %36 : vector<8xf32> to vector<1x8xf32>
    %c0_36 = arith.constant 0 : index
    %c0_37 = arith.constant 0 : index
    %38 = vector.load %arg9[%c0_36, %c0_37] : memref<1x8xf32, #tpu.memory_space<vmem>>, vector<1x8xf32>
    %39 = arith.addf %37, %38 : vector<1x8xf32>
    %cst_38 = arith.constant 0.000000e+00 : f32
    %40 = vector.broadcast %cst_38 : f32 to vector<1x8xf32>
    %41 = arith.maximumf %39, %40 : vector<1x8xf32>
    %c0_39 = arith.constant 0 : index
    %c0_40 = arith.constant 0 : index
    %42 = vector.load %arg10[%c0_39, %c0_40] : memref<128x8xf32, #tpu.memory_space<vmem>>, vector<128x8xf32>
    %43 = vector.broadcast %41 : vector<1x8xf32> to vector<128x8xf32>
    %44 = arith.mulf %42, %43 : vector<128x8xf32>
    %cst_41 = arith.constant dense<0.000000e+00> : vector<128xf32>
    %45 = vector.multi_reduction <add>, %44, %cst_41 [1] : vector<128x8xf32> to vector<128xf32>
    %46 = vector.shape_cast %45 : vector<128xf32> to vector<128x1xf32>
    %c0_42 = arith.constant 0 : index
    %c0_43 = arith.constant 0 : index
    %47 = vector.load %arg11[%c0_42, %c0_43] : memref<128x1xf32, #tpu.memory_space<vmem>>, vector<128x1xf32>
    %48 = arith.addf %46, %47 : vector<128x1xf32>
    %49 = arith.negf %48 : vector<128x1xf32>
    %50 = math.exp %49 : vector<128x1xf32>
    %cst_44 = arith.constant 1.000000e+00 : f32
    %51 = vector.broadcast %cst_44 : f32 to vector<128x1xf32>
    %52 = arith.addf %51, %50 : vector<128x1xf32>
    %53 = arith.divf %51, %52 : vector<128x1xf32>
    %54 = vector.broadcast %53 : vector<128x1xf32> to vector<128x128xf32>
    %55 = arith.mulf %28, %54 : vector<128x128xf32>
    %c0_45 = arith.constant 0 : index
    %c0_46 = arith.constant 0 : index
    %56 = vector.load %arg6[%c0_45, %c0_46] : memref<128x64xbf16, #tpu.memory_space<vmem>>, vector<128x64xbf16>
    %cst_47 = arith.constant dense<0.000000e+00> : vector<128x128xf32>
    %57 = tpu.matmul %56, %1, %cst_47 {dimension_numbers = #tpu.dot_dimension_numbers<[1], [0], [0], [1], [0, 0, 1, 1], [], []>} : vector<128x64xbf16>, vector<64x128xbf16>, vector<128x128xf32> -> vector<128x128xf32>
    %c0_48 = arith.constant 0 : index
    %c0_49 = arith.constant 0 : index
    %58 = vector.load %arg7[%c0_48, %c0_49] : memref<128x1xf32, #tpu.memory_space<vmem>>, vector<128x1xf32>
    %59 = vector.broadcast %58 : vector<128x1xf32> to vector<128x128xf32>
    %60 = arith.addf %57, %59 : vector<128x128xf32>
    %61 = arith.addf %55, %60 : vector<128x128xf32>
    %cst_50 = arith.constant 0.000000e+00 : f32
    %62 = vector.broadcast %cst_50 : f32 to vector<128x128xf32>
    %63 = arith.maximumf %61, %62 : vector<128x128xf32>
    %c0_51 = arith.constant 0 : index
    %c0_52 = arith.constant 0 : index
    %c0_53 = arith.constant 0 : index
    %64 = vector.load %arg12[%c0_51, %c0_52, %c0_53] : memref<1x128x128xf32, #tpu.memory_space<vmem>>, vector<1x128x128xf32>
    %65 = vector.shape_cast %64 : vector<1x128x128xf32> to vector<128x128xf32>
    %66 = vector.shape_cast %63 : vector<128x128xf32> to vector<1x128x128xf32>
    tpu.vector_store %arg12[%c0_51, %c0_52, %c0_53], %66 {strides = array<i32>} : memref<1x128x128xf32, #tpu.memory_space<vmem>>, vector<1x128x128xf32>,
    return
  }
  func.func @transform_0(%arg0: i32) -> (i32, i32, i32) {
    %c0_i32 = arith.constant 0 : i32
    %c0_i32_0 = arith.constant 0 : i32
    %c0_i32_1 = arith.constant 0 : i32
    return %arg0, %c0_i32, %c0_i32_0 : i32, i32, i32
  }
  func.func @transform_1(%arg0: i32) -> (i32, i32) {
    %c0_i32 = arith.constant 0 : i32
    %c0_i32_0 = arith.constant 0 : i32
    %c0_i32_1 = arith.constant 0 : i32
    return %c0_i32, %c0_i32_0 : i32, i32
  }
  func.func @transform_2(%arg0: i32) -> (i32, i32) {
    %c0_i32 = arith.constant 0 : i32
    %c0_i32_0 = arith.constant 0 : i32
    %c0_i32_1 = arith.constant 0 : i32
    return %c0_i32, %c0_i32_0 : i32, i32
  }
  func.func @transform_3(%arg0: i32) -> (i32, i32) {
    %c0_i32 = arith.constant 0 : i32
    %c0_i32_0 = arith.constant 0 : i32
    %c0_i32_1 = arith.constant 0 : i32
    return %c0_i32, %c0_i32_0 : i32, i32
  }
  func.func @transform_4(%arg0: i32) -> (i32, i32) {
    %c0_i32 = arith.constant 0 : i32
    %c0_i32_0 = arith.constant 0 : i32
    %c0_i32_1 = arith.constant 0 : i32
    return %c0_i32, %c0_i32_0 : i32, i32
  }
  func.func @transform_5(%arg0: i32) -> (i32, i32) {
    %c0_i32 = arith.constant 0 : i32
    %c0_i32_0 = arith.constant 0 : i32
    %c0_i32_1 = arith.constant 0 : i32
    return %c0_i32, %c0_i32_0 : i32, i32
  }
  func.func @transform_6(%arg0: i32) -> (i32, i32) {
    %c0_i32 = arith.constant 0 : i32
    %c0_i32_0 = arith.constant 0 : i32
    %c0_i32_1 = arith.constant 0 : i32
    return %c0_i32, %c0_i32_0 : i32, i32
  }
  func.func @transform_7(%arg0: i32) -> (i32, i32) {
    %c0_i32 = arith.constant 0 : i32
    %c0_i32_0 = arith.constant 0 : i32
    %c0_i32_1 = arith.constant 0 : i32
    return %c0_i32, %c0_i32_0 : i32, i32
  }
  func.func @transform_8(%arg0: i32) -> (i32, i32) {
    %c0_i32 = arith.constant 0 : i32
    %c0_i32_0 = arith.constant 0 : i32
    %c0_i32_1 = arith.constant 0 : i32
    return %c0_i32, %c0_i32_0 : i32, i32
  }
  func.func @transform_9(%arg0: i32) -> (i32, i32) {
    %c0_i32 = arith.constant 0 : i32
    %c0_i32_0 = arith.constant 0 : i32
    %c0_i32_1 = arith.constant 0 : i32
    return %c0_i32, %c0_i32_0 : i32, i32
  }
  func.func @transform_10(%arg0: i32) -> (i32, i32) {
    %c0_i32 = arith.constant 0 : i32
    %c0_i32_0 = arith.constant 0 : i32
    %c0_i32_1 = arith.constant 0 : i32
    return %c0_i32, %c0_i32_0 : i32, i32
  }
  func.func @transform_11(%arg0: i32) -> (i32, i32, i32) {
    %c0_i32 = arith.constant 0 : i32
    %c0_i32_0 = arith.constant 0 : i32
    %c0_i32_1 = arith.constant 0 : i32
    return %arg0, %c0_i32, %c0_i32_0 : i32, i32, i32
  }
}

</mosaic_0001>

<llo_original>
// kernel: basic_block_1d.1
$region0: #{basic_block_1d.1}
  #allocation0 [shape = 'u32[]', space=smem, size = 0x4, offset = 0x4, fixed_abs, tag = 'smem constant byte address 0x4 - core index']
  #allocation1 [shape = 'u32[144,128]{1,0:T(1,128)}', space=vmem, size = 0x12000, scoped, tag = 'internal scratch']
  #allocation2 [shape = 'bf16[64,384]{1,0:T(16,128)(2,1)}', space=vmem, size = 0xc000, scoped, tag = 'scratch operand']
  #allocation3 [shape = 'bf16[128,384]{1,0:T(16,128)(2,1)}', space=vmem, size = 0x18000, scoped, tag = 'scratch operand']
  %s0 = inlined_call_operand.vmem [shape: bf16[2,64,128], index: 0, kind: input, shape index: {}]
  %s1 = inlined_call_operand.vmem [shape: bf16[128,192], index: 1, kind: input, shape index: {}]
  %s2 = inlined_call_operand.vmem [shape: f32[128,1], index: 2, kind: input, shape index: {}]
  %s3 = inlined_call_operand.vmem [shape: bf16[128,384], index: 3, kind: input, shape index: {}]
  %s4 = inlined_call_operand.vmem [shape: f32[128,1], index: 4, kind: input, shape index: {}]
  %s5 = inlined_call_operand.vmem [shape: bf16[128,64], index: 5, kind: input, shape index: {}]
  %s6 = inlined_call_operand.vmem [shape: f32[128,1], index: 6, kind: input, shape index: {}]
  %s7 = inlined_call_operand.vmem [shape: f32[128,8], index: 7, kind: input, shape index: {}]
  %s8 = inlined_call_operand.vmem [shape: f32[1,8], index: 8, kind: input, shape index: {}]
  %s9 = inlined_call_operand.vmem [shape: f32[128,8], index: 9, kind: input, shape index: {}]
  %s10 = inlined_call_operand.vmem [shape: f32[128,1], index: 10, kind: input, shape index: {}]
  %s11 = inlined_call_operand.hbm [shape: f32[2,128,128], index: 11, kind: output, shape index: {}]
  %s12 = sld [smem:[#allocation0]]
  $region77: #{basic_block_1d.1} parent=0
    _
  %s14 = ssub.s32 1, %s12
  %s15 = scalar_select 0, %s14, %s12
  $region1: #{basic_block_1d.1} parent=0
    #allocation4 [shape = 'u8[131072]{0}', space=vmem, size = 0x20000, scoped, tag = 'output window, operand 0']
    #allocation5 [shape = 's32[2]{0}', space=sflag, size = 0x8, scoped, tag = 'scoped memory for basic_block_1d.1']
    %16 = vsyncpa [#allocation5], 0
    %s17 = scalar_lea.sflag [#allocation5], 1
    %18 = vsyncpa %s17, 0
    loop: start=0, step=1, limit=4
    $region2: #{basic_block_1d.1} parent=1 // loop_pre_header
      _
    $region3: #{basic_block_1d.1} parent=1 // loop_header
      %s20 = sphi 0, %s24
      %p21 = scmp.ge.s32.totalorder %s20, 4
      %s30 = sphi 0, %s32
      %s33 = sphi 0, %s30
      %s34 = sphi 0, %s33
      %s50 = sphi 0, %s34
      %s54 = sphi 0, %s54
      %s56 = sphi 0, %s54
      %s57 = sphi 0, %s56
      %s71 = sphi 0, %s57
      %s75 = sphi 0, %s75
      %s77 = sphi 0, %s75
      %s78 = sphi 0, %s77
      %s92 = sphi 0, %s78
      %s96 = sphi 0, %s96
      %s98 = sphi 0, %s96
      %s99 = sphi 0, %s98
      %s113 = sphi 0, %s99
      %s117 = sphi 0, %s117
      %s119 = sphi 0, %s117
      %s120 = sphi 0, %s119
      %s134 = sphi 0, %s120
      %s138 = sphi 0, %s138
      %s140 = sphi 0, %s138
      %s141 = sphi 0, %s140
      %s155 = sphi 0, %s141
      %s159 = sphi 0, %s159
      %s161 = sphi 0, %s159
      %s162 = sphi 0, %s161
      %s176 = sphi 0, %s162
      %s180 = sphi 0, %s180
      %s182 = sphi 0, %s180
      %s183 = sphi 0, %s182
      %s197 = sphi 0, %s183
      %s201 = sphi 0, %s201
      %s203 = sphi 0, %s201
      %s204 = sphi 0, %s203
      %s218 = sphi 0, %s204
      %s222 = sphi 0, %s222
      %s224 = sphi 0, %s222
      %s225 = sphi 0, %s224
      %s239 = sphi 0, %s225
      %s243 = sphi 0, %s243
      %s245 = sphi 0, %s243
      %s246 = sphi 0, %s245
      %s260 = sphi 0, %s246
      %s266 = sphi 0, %s268
      %s269 = sphi 0, %s266
      %s270 = sphi 0, %s269
      %s286 = sphi 0, %s270
    $region4: #{basic_block_1d.1} parent=1 // loop_header_branch
      %23 = sbr.rel (%p21) target = $region8
    $region5: #{basic_block_1d.1} parent=1 // loop_body
      %s25 = ssub.s32 %s20, 1
      %s26 = ssub.s32 %s20, 2
      %s27 = sadd.s32 %s20, 1
      %s28 = ssub.s32 %s20, %s27
      %p29 = scmp.eq.s32.totalorder %s28, 0
      %s31 = sadd.s32 %s30, 1
      %s32 = scalar_select %p29, %s30, %s31
      %p35 = pneg %p29
      %p36 = scmp.eq.s32.totalorder %s20, 1
      %p37 = por %p35, %p36
      %p38 = scmp.ne.s32.totalorder %s30, %s33
      %p39 = scmp.eq.s32.totalorder %s20, 0
      %p40 = por %p38, %p39
      %p41 = scmp.ne.s32.totalorder %s30, %s33
      %p42 = scmp.eq.s32.totalorder %s25, 1
      %p43 = por %p41, %p42
      %p44 = scmp.ne.s32.totalorder %s33, %s34
      %p45 = scmp.eq.s32.totalorder %s25, 0
      %p46 = por %p44, %p45
      %p47 = scmp.ne.s32.totalorder %s33, %s34
      %p48 = scmp.eq.s32.totalorder %s26, 1
      %p49 = por %p47, %p48
      %p51 = scmp.ne.s32.totalorder %s34, %s50
      %p52 = scmp.eq.s32.totalorder %s26, 0
      %p53 = por %p51, %p52
      %s55 = sadd.s32 %s54, 1
      %p58 = scmp.eq.s32.totalorder %s20, 1
      %p59 = scmp.ne.s32.totalorder %s54, %s56
      %p60 = scmp.eq.s32.totalorder %s20, 0
      %p61 = por %p59, %p60
      %p62 = scmp.ne.s32.totalorder %s54, %s56
      %p63 = scmp.eq.s32.totalorder %s25, 1
      %p64 = por %p62, %p63
      %p65 = scmp.ne.s32.totalorder %s56, %s57
      %p66 = scmp.eq.s32.totalorder %s25, 0
      %p67 = por %p65, %p66
      %p68 = scmp.ne.s32.totalorder %s56, %s57
      %p69 = scmp.eq.s32.totalorder %s26, 1
      %p70 = por %p68, %p69
      %p72 = scmp.ne.s32.totalorder %s57, %s71
      %p73 = scmp.eq.s32.totalorder %s26, 0
      %p74 = por %p72, %p73
      %s76 = sadd.s32 %s75, 1
      %p79 = scmp.eq.s32.totalorder %s20, 1
      %p80 = scmp.ne.s32.totalorder %s75, %s77
      %p81 = scmp.eq.s32.totalorder %s20, 0
      %p82 = por %p80, %p81
      %p83 = scmp.ne.s32.totalorder %s75, %s77
      %p84 = scmp.eq.s32.totalorder %s25, 1
      %p85 = por %p83, %p84
      %p86 = scmp.ne.s32.totalorder %s77, %s78
      %p87 = scmp.eq.s32.totalorder %s25, 0
      %p88 = por %p86, %p87
      %p89 = scmp.ne.s32.totalorder %s77, %s78
      %p90 = scmp.eq.s32.totalorder %s26, 1
      %p91 = por %p89, %p90
      %p93 = scmp.ne.s32.totalorder %s78, %s92
      %p94 = scmp.eq.s32.totalorder %s26, 0
      %p95 = por %p93, %p94
      %s97 = sadd.s32 %s96, 1
      %p100 = scmp.eq.s32.totalorder %s20, 1
      %p101 = scmp.ne.s32.totalorder %s96, %s98
      %p102 = scmp.eq.s32.totalorder %s20, 0
      %p103 = por %p101, %p102
      %p104 = scmp.ne.s32.totalorder %s96, %s98
      %p105 = scmp.eq.s32.totalorder %s25, 1
      %p106 = por %p104, %p105
      %p107 = scmp.ne.s32.totalorder %s98, %s99
      %p108 = scmp.eq.s32.totalorder %s25, 0
      %p109 = por %p107, %p108
      %p110 = scmp.ne.s32.totalorder %s98, %s99
      %p111 = scmp.eq.s32.totalorder %s26, 1
      %p112 = por %p110, %p111
      %p114 = scmp.ne.s32.totalorder %s99, %s113
      %p115 = scmp.eq.s32.totalorder %s26, 0
      %p116 = por %p114, %p115
      %s118 = sadd.s32 %s117, 1
      %p121 = scmp.eq.s32.totalorder %s20, 1
      %p122 = scmp.ne.s32.totalorder %s117, %s119
      %p123 = scmp.eq.s32.totalorder %s20, 0
      %p124 = por %p122, %p123
      %p125 = scmp.ne.s32.totalorder %s117, %s119
      %p126 = scmp.eq.s32.totalorder %s25, 1
      %p127 = por %p125, %p126
      %p128 = scmp.ne.s32.totalorder %s119, %s120
      %p129 = scmp.eq.s32.totalorder %s25, 0
      %p130 = por %p128, %p129
      %p131 = scmp.ne.s32.totalorder %s119, %s120
      %p132 = scmp.eq.s32.totalorder %s26, 1
      %p133 = por %p131, %p132
      %p135 = scmp.ne.s32.totalorder %s120, %s134
      %p136 = scmp.eq.s32.totalorder %s26, 0
      %p137 = por %p135, %p136
      %s139 = sadd.s32 %s138, 1
      %p142 = scmp.eq.s32.totalorder %s20, 1
      %p143 = scmp.ne.s32.totalorder %s138, %s140
      %p144 = scmp.eq.s32.totalorder %s20, 0
      %p145 = por %p143, %p144
      %p146 = scmp.ne.s32.totalorder %s138, %s140
      %p147 = scmp.eq.s32.totalorder %s25, 1
      %p148 = por %p146, %p147
      %p149 = scmp.ne.s32.totalorder %s140, %s141
      %p150 = scmp.eq.s32.totalorder %s25, 0
      %p151 = por %p149, %p150
      %p152 = scmp.ne.s32.totalorder %s140, %s141
      %p153 = scmp.eq.s32.totalorder %s26, 1
      %p154 = por %p152, %p153
      %p156 = scmp.ne.s32.totalorder %s141, %s155
      %p157 = scmp.eq.s32.totalorder %s26, 0
      %p158 = por %p156, %p157
      %s160 = sadd.s32 %s159, 1
      %p163 = scmp.eq.s32.totalorder %s20, 1
      %p164 = scmp.ne.s32.totalorder %s159, %s161
      %p165 = scmp.eq.s32.totalorder %s20, 0
      %p166 = por %p164, %p165
      %p167 = scmp.ne.s32.totalorder %s159, %s161
      %p168 = scmp.eq.s32.totalorder %s25, 1
      %p169 = por %p167, %p168
      %p170 = scmp.ne.s32.totalorder %s161, %s162
      %p171 = scmp.eq.s32.totalorder %s25, 0
      %p172 = por %p170, %p171
      %p173 = scmp.ne.s32.totalorder %s161, %s162
      %p174 = scmp.eq.s32.totalorder %s26, 1
      %p175 = por %p173, %p174
      %p177 = scmp.ne.s32.totalorder %s162, %s176
      %p178 = scmp.eq.s32.totalorder %s26, 0
      %p179 = por %p177, %p178
      %s181 = sadd.s32 %s180, 1
      %p184 = scmp.eq.s32.totalorder %s20, 1
      %p185 = scmp.ne.s32.totalorder %s180, %s182
      %p186 = scmp.eq.s32.totalorder %s20, 0
      %p187 = por %p185, %p186
      %p188 = scmp.ne.s32.totalorder %s180, %s182
      %p189 = scmp.eq.s32.totalorder %s25, 1
      %p190 = por %p188, %p189
      %p191 = scmp.ne.s32.totalorder %s182, %s183
      %p192 = scmp.eq.s32.totalorder %s25, 0
      %p193 = por %p191, %p192
      %p194 = scmp.ne.s32.totalorder %s182, %s183
      %p195 = scmp.eq.s32.totalorder %s26, 1
      %p196 = por %p194, %p195
      %p198 = scmp.ne.s32.totalorder %s183, %s197
      %p199 = scmp.eq.s32.totalorder %s26, 0
      %p200 = por %p198, %p199
      %s202 = sadd.s32 %s201, 1
      %p205 = scmp.eq.s32.totalorder %s20, 1
      %p206 = scmp.ne.s32.totalorder %s201, %s203
      %p207 = scmp.eq.s32.totalorder %s20, 0
      %p208 = por %p206, %p207
      %p209 = scmp.ne.s32.totalorder %s201, %s203
      %p210 = scmp.eq.s32.totalorder %s25, 1
      %p211 = por %p209, %p210
      %p212 = scmp.ne.s32.totalorder %s203, %s204
      %p213 = scmp.eq.s32.totalorder %s25, 0
      %p214 = por %p212, %p213
      %p215 = scmp.ne.s32.totalorder %s203, %s204
      %p216 = scmp.eq.s32.totalorder %s26, 1
      %p217 = por %p215, %p216
      %p219 = scmp.ne.s32.totalorder %s204, %s218
      %p220 = scmp.eq.s32.totalorder %s26, 0
      %p221 = por %p219, %p220
      %s223 = sadd.s32 %s222, 1
      %p226 = scmp.eq.s32.totalorder %s20, 1
      %p227 = scmp.ne.s32.totalorder %s222, %s224
      %p228 = scmp.eq.s32.totalorder %s20, 0
      %p229 = por %p227, %p228
      %p230 = scmp.ne.s32.totalorder %s222, %s224
      %p231 = scmp.eq.s32.totalorder %s25, 1
      %p232 = por %p230, %p231
      %p233 = scmp.ne.s32.totalorder %s224, %s225
      %p234 = scmp.eq.s32.totalorder %s25, 0
      %p235 = por %p233, %p234
      %p236 = scmp.ne.s32.totalorder %s224, %s225
      %p237 = scmp.eq.s32.totalorder %s26, 1
      %p238 = por %p236, %p237
      %p240 = scmp.ne.s32.totalorder %s225, %s239
      %p241 = scmp.eq.s32.totalorder %s26, 0
      %p242 = por %p240, %p241
      %s244 = sadd.s32 %s243, 1
      %p247 = scmp.eq.s32.totalorder %s20, 1
      %p248 = scmp.ne.s32.totalorder %s243, %s245
      %p249 = scmp.eq.s32.totalorder %s20, 0
      %p250 = por %p248, %p249
      %p251 = scmp.ne.s32.totalorder %s243, %s245
      %p252 = scmp.eq.s32.totalorder %s25, 1
      %p253 = por %p251, %p252
      %p254 = scmp.ne.s32.totalorder %s245, %s246
      %p255 = scmp.eq.s32.totalorder %s25, 0
      %p256 = por %p254, %p255
      %p257 = scmp.ne.s32.totalorder %s245, %s246
      %p258 = scmp.eq.s32.totalorder %s26, 1
      %p259 = por %p257, %p258
      %p261 = scmp.ne.s32.totalorder %s246, %s260
      %p262 = scmp.eq.s32.totalorder %s26, 0
      %p263 = por %p261, %p262
      %s264 = ssub.s32 %s20, %s27
      %p265 = scmp.eq.s32.totalorder %s264, 0
      %s267 = sadd.s32 %s266, 1
      %s268 = scalar_select %p265, %s266, %s267
      %p271 = pneg %p265
      %p272 = scmp.eq.s32.totalorder %s20, 1
      %p273 = por %p271, %p272
      %p274 = scmp.ne.s32.totalorder %s266, %s269
      %p275 = scmp.eq.s32.totalorder %s20, 0
      %p276 = por %p274, %p275
      %p277 = scmp.ne.s32.totalorder %s266, %s269
      %p278 = scmp.eq.s32.totalorder %s25, 1
      %p279 = por %p277, %p278
      %p280 = scmp.ne.s32.totalorder %s269, %s270
      %p281 = scmp.eq.s32.totalorder %s25, 0
      %p282 = por %p280, %p281
      %p283 = scmp.ne.s32.totalorder %s269, %s270
      %p284 = scmp.eq.s32.totalorder %s26, 1
      %p285 = por %p283, %p284
      %p287 = scmp.ne.s32.totalorder %s270, %s286
      %p288 = scmp.eq.s32.totalorder %s26, 0
      %p289 = por %p287, %p288
      %p290 = scmp.le.s32.totalorder 1, %s20
      %p291 = scmp.lt.s32.totalorder %s20, 3
      %p292 = pnand %p290, %p291
      %p293 = pneg %p292
      // Predicated region
      $region9: #{basic_block_1d.1} parent=5 // pred_check
        _
      $region10: #{basic_block_1d.1} parent=5 // pred_check_branch
        %295 = sbr.rel (%p292) target = $region12
      $region11: #{basic_block_1d.1} parent=5 // pred_region
        %s296 = ssub.s32 %s20, 1
        // Predicated region
        $region13: #{basic_block_1d.1} parent=11 // pred_check
          %p297 = pneg %p67
        $region14: #{basic_block_1d.1} parent=11 // pred_check_branch
          %299 = sbr.rel (%p297) target = $region16
        $region15: #{basic_block_1d.1} parent=11 // pred_region
          _
        $region16: #{basic_block_1d.1} parent=11 // pred_fallthru
          _
        // Predicated region
        $region17: #{basic_block_1d.1} parent=11 // pred_check
          %p300 = pneg %p88
        $region18: #{basic_block_1d.1} parent=11 // pred_check_branch
          %302 = sbr.rel (%p300) target = $region20
        $region19: #{basic_block_1d.1} parent=11 // pred_region
          _
        $region20: #{basic_block_1d.1} parent=11 // pred_fallthru
          _
        // Predicated region
        $region21: #{basic_block_1d.1} parent=11 // pred_check
          %p303 = pneg %p109
        $region22: #{basic_block_1d.1} parent=11 // pred_check_branch
          %305 = sbr.rel (%p303) target = $region24
        $region23: #{basic_block_1d.1} parent=11 // pred_region
          _
        $region24: #{basic_block_1d.1} parent=11 // pred_fallthru
          _
        // Predicated region
        $region25: #{basic_block_1d.1} parent=11 // pred_check
          %p306 = pneg %p130
        $region26: #{basic_block_1d.1} parent=11 // pred_check_branch
          %308 = sbr.rel (%p306) target = $region28
        $region27: #{basic_block_1d.1} parent=11 // pred_region
          _
        $region28: #{basic_block_1d.1} parent=11 // pred_fallthru
          _
        // Predicated region
        $region29: #{basic_block_1d.1} parent=11 // pred_check
          %p309 = pneg %p151
        $region30: #{basic_block_1d.1} parent=11 // pred_check_branch
          %311 = sbr.rel (%p309) target = $region32
        $region31: #{basic_block_1d.1} parent=11 // pred_region
          _
        $region32: #{basic_block_1d.1} parent=11 // pred_fallthru
          _
        // Predicated region
        $region33: #{basic_block_1d.1} parent=11 // pred_check
          %p312 = pneg %p172
        $region34: #{basic_block_1d.1} parent=11 // pred_check_branch
          %314 = sbr.rel (%p312) target = $region36
        $region35: #{basic_block_1d.1} parent=11 // pred_region
          _
        $region36: #{basic_block_1d.1} parent=11 // pred_fallthru
          _
        // Predicated region
        $region37: #{basic_block_1d.1} parent=11 // pred_check
          %p315 = pneg %p193
        $region38: #{basic_block_1d.1} parent=11 // pred_check_branch
          %317 = sbr.rel (%p315) target = $region40
        $region39: #{basic_block_1d.1} parent=11 // pred_region
          _
        $region40: #{basic_block_1d.1} parent=11 // pred_fallthru
          _
        // Predicated region
        $region41: #{basic_block_1d.1} parent=11 // pred_check
          %p318 = pneg %p214
        $region42: #{basic_block_1d.1} parent=11 // pred_check_branch
          %320 = sbr.rel (%p318) target = $region44
        $region43: #{basic_block_1d.1} parent=11 // pred_region
          _
        $region44: #{basic_block_1d.1} parent=11 // pred_fallthru
          _
        // Predicated region
        $region45: #{basic_block_1d.1} parent=11 // pred_check
          %p321 = pneg %p235
        $region46: #{basic_block_1d.1} parent=11 // pred_check_branch
          %323 = sbr.rel (%p321) target = $region48
        $region47: #{basic_block_1d.1} parent=11 // pred_region
          _
        $region48: #{basic_block_1d.1} parent=11 // pred_fallthru
          _
        // Predicated region
        $region49: #{basic_block_1d.1} parent=11 // pred_check
          %p324 = pneg %p256
        $region50: #{basic_block_1d.1} parent=11 // pred_check_branch
          %326 = sbr.rel (%p324) target = $region52
        $region51: #{basic_block_1d.1} parent=11 // pred_region
          _
        $region52: #{basic_block_1d.1} parent=11 // pred_fallthru
          _
      $region12: #{basic_block_1d.1} parent=5 // pred_fallthru
        _
      %p327 = scmp.lt.s32.totalorder %s20, 2
      // Predicated region
      $region53: #{basic_block_1d.1} parent=5 // pred_check
        %p328 = pneg %p327
      $region54: #{basic_block_1d.1} parent=5 // pred_check_branch
        %330 = sbr.rel (%p328) target = $region56
      $region55: #{basic_block_1d.1} parent=5 // pred_region
        // Predicated region
        $region57: #{basic_block_1d.1} parent=55 // pred_check
          %p331 = pneg %p40
        $region58: #{basic_block_1d.1} parent=55 // pred_check_branch
          %333 = sbr.rel (%p331) target = $region60
        $region59: #{basic_block_1d.1} parent=55 // pred_region
          %p334 = scmp.lt.s32.totalorder %s20, 1
          %s335 = scalar_select %p334, %s20, 1
          %s336 = smul.addr %s335, 8
          %s337 = smul.addr %s336, 4
          %s338 = scalar_lea.vmem %s0, %s337
        $region60: #{basic_block_1d.1} parent=55 // pred_fallthru
          _
      $region56: #{basic_block_1d.1} parent=5 // pred_fallthru
        _
      %p339 = scmp.le.s32.totalorder 1, %s20
      %p340 = scmp.lt.s32.totalorder %s20, 3
      %p341 = pnand %p339, %p340
      %p342 = pneg %p341
      // Predicated region
      $region61: #{basic_block_1d.1} parent=5 // pred_check
        _
      $region62: #{basic_block_1d.1} parent=5 // pred_check_branch
        %344 = sbr.rel (%p341) target = $region64
      $region63: #{basic_block_1d.1} parent=5 // pred_region
        %s345 = ssub.s32 %s20, 1
        %p346 = scmp.lt.s32.totalorder %s25, 1
        %s347 = scalar_select %p346, %s25, 1
        %s348 = smul.addr %s347, 8
        %s349 = smul.addr %s348, 4
        %s350 = scalar_lea.vmem %s0, %s349
        %p351 = pneg %p46
        %p352 = pneg %p43
        %p353 = pneg %p67
        %p354 = pneg %p64
        %p355 = pneg %p88
        %p356 = pneg %p85
        %p357 = pneg %p109
        %p358 = pneg %p106
        %p359 = pneg %p130
        %p360 = pneg %p127
        %p361 = pneg %p151
        %p362 = pneg %p148
        %p363 = pneg %p172
        %p364 = pneg %p169
        %p365 = pneg %p193
        %p366 = pneg %p190
        %p367 = pneg %p214
        %p368 = pneg %p211
        %p369 = pneg %p235
        %p370 = pneg %p232
        %p371 = pneg %p256
        %p372 = pneg %p253
        %p373 = pneg %p282
        %p374 = pneg %p279
        %s375 = sand.u32 %s269, 1
        %s376 = scalar_lea.sflag [#allocation5], %s375
        %s377 = sand.u32 %s269, 1
        %s378 = smul.addr %s377, 128
        %s379 = scalar_lea.vmem [#allocation4], %s378
        %p380 = scmp.lt.s32.totalorder %s25, 1
        %s381 = scalar_select %p380, %s25, 1
        %s382 = smul.addr %s381, 8
        %s383 = smul.addr %s382, 4
        %s384 = scalar_lea.vmem %s0, %s383
        %v386 = vld [vmem:[%s384] sm:$0xf]
        %v387 = vld [vmem:[%s384 + $0x4] sm:$0xf]
        %v388 = vld [vmem:[%s384 + $0x8] sm:$0xf]
        %v389 = vld [vmem:[%s384 + $0xc] sm:$0xf]
        %v390 = vld [vmem:[%s384 + $0x10] sm:$0xf]
        %v391 = vld [vmem:[%s384 + $0x14] sm:$0xf]
        %v392 = vld [vmem:[%s384 + $0x18] sm:$0xf]
        %v393 = vld [vmem:[%s384 + $0x1c] sm:$0xf]
        %394 = vst [vmem:[#allocation2] sm:$0xff] 0
        %395 = vst [vmem:[#allocation2 + $0x8] sm:$0xff] 0
        %396 = vst [vmem:[#allocation2 + $0x10] sm:$0xff] 0
        %397 = vst [vmem:[#allocation2 + $0x18] sm:$0xff] 0
        %398 = vst [vmem:[#allocation2 + $0x20] sm:$0xff] 0
        %399 = vst [vmem:[#allocation2 + $0x28] sm:$0xff] 0
        %400 = vst [vmem:[#allocation2 + $0x30] sm:$0xff] 0
        %401 = vst [vmem:[#allocation2 + $0x38] sm:$0xff] 0
        %402 = vst [vmem:[#allocation2 + $0x40] sm:$0xff] 0
        %403 = vst [vmem:[#allocation2 + $0x48] sm:$0xff] 0
        %404 = vst [vmem:[#allocation2 + $0x50] sm:$0xff] 0
        %405 = vst [vmem:[#allocation2 + $0x58] sm:$0xff] 0
        %v414 = vunpack.c.l.b16 %v386
        %v415 = vunpack.c.l.b16 %v387
        %v416 = vunpack.c.l.b16 %v388
        %v417 = vunpack.c.l.b16 %v389
        %v418 = vunpack.c.l.b16 %v390
        %v419 = vunpack.c.l.b16 %v391
        %v420 = vunpack.c.l.b16 %v392
        %v421 = vunpack.c.l.b16 %v393
        %v422 = vpack.c.b16 %v415, %v414
        %v423 = vpack.c.b16 %v417, %v416
        %v424 = vpack.c.b16 %v419, %v418
        %v425 = vpack.c.b16 %v421, %v420
        %430 = vst [vmem:[#allocation2 + $0x8] sm:$0xff] %v422
        %431 = vst [vmem:[#allocation2 + $0x20] sm:$0xff] %v423
        %432 = vst [vmem:[#allocation2 + $0x38] sm:$0xff] %v424
        %433 = vst [vmem:[#allocation2 + $0x50] sm:$0xff] %v425
        %v434 = vld [vmem:[#allocation2] sm:$0xff]
        %v435 = vld [vmem:[#allocation2 + $0x8] sm:$0xff]
        %v436 = vld [vmem:[#allocation2 + $0x18] sm:$0xff]
        %v437 = vld [vmem:[#allocation2 + $0x20] sm:$0xff]
        %v438 = vld [vmem:[#allocation2 + $0x30] sm:$0xff]
        %v439 = vld [vmem:[#allocation2 + $0x38] sm:$0xff]
        %v440 = vld [vmem:[#allocation2 + $0x48] sm:$0xff]
        %v441 = vld [vmem:[#allocation2 + $0x50] sm:$0xff]
        %v442 = vld [vmem:[#allocation2 + $0x8] sm:$0xff]
        %v443 = vld [vmem:[#allocation2 + $0x10] sm:$0xff]
        %v444 = vld [vmem:[#allocation2 + $0x20] sm:$0xff]
        %v445 = vld [vmem:[#allocation2 + $0x28] sm:$0xff]
        %v446 = vld [vmem:[#allocation2 + $0x38] sm:$0xff]
        %v447 = vld [vmem:[#allocation2 + $0x40] sm:$0xff]
        %v448 = vld [vmem:[#allocation2 + $0x50] sm:$0xff]
        %v449 = vld [vmem:[#allocation2 + $0x58] sm:$0xff]
        %454 = vrot.lane.b32.xlu0 %v435, 127
        %v455 = vpop.permute.xlu0 %454
        %456 = vrot.lane.b32.xlu0 %v437, 127
        %v457 = vpop.permute.xlu0 %456
        %458 = vrot.lane.b32.xlu0 %v439, 127
        %v459 = vpop.permute.xlu0 %458
        %460 = vrot.lane.b32.xlu0 %v441, 127
        %v461 = vpop.permute.xlu0 %460
        %470 = vrot.lane.b32.xlu0 %v442, 126
        %v471 = vpop.permute.xlu0 %470
        %472 = vrot.lane.b32.xlu0 %v443, 126
        %v473 = vpop.permute.xlu0 %472
        %474 = vrot.lane.b32.xlu0 %v444, 126
        %v475 = vpop.permute.xlu0 %474
        %476 = vrot.lane.b32.xlu0 %v445, 126
        %v477 = vpop.permute.xlu0 %476
        %478 = vrot.lane.b32.xlu0 %v446, 126
        %v479 = vpop.permute.xlu0 %478
        %480 = vrot.lane.b32.xlu0 %v447, 126
        %v481 = vpop.permute.xlu0 %480
        %482 = vrot.lane.b32.xlu0 %v448, 126
        %v483 = vpop.permute.xlu0 %482
        %484 = vrot.lane.b32.xlu0 %v449, 126
        %v485 = vpop.permute.xlu0 %484
        %vm486 = vcmask 1031168
        %v487 = vsel %vm486, %v471, %v473
        %v488 = vsel %vm486, %v475, %v477
        %v489 = vsel %vm486, %v479, %v481
        %v490 = vsel %vm486, %v483, %v485
        %v491 = vld [vmem:[%s1] sm:$0xff]
        %v492 = vld [vmem:[%s1 + $0x8] sm:$0xff]
        %v493 = vld [vmem:[%s1 + $0x10] sm:$0xff]
        %v494 = vld [vmem:[%s1 + $0x18] sm:$0xff]
        %v495 = vld [vmem:[%s1 + $0x20] sm:$0xff]
        %v496 = vld [vmem:[%s1 + $0x28] sm:$0xff]
        %v497 = vld [vmem:[%s1 + $0x30] sm:$0xff]
        %v498 = vld [vmem:[%s1 + $0x38] sm:$0xff]
        %v499 = vld [vmem:[%s1 + $0x40] sm:$0xff]
        %v500 = vld [vmem:[%s1 + $0x48] sm:$0xff]
        %v501 = vld [vmem:[%s1 + $0x50] sm:$0xff]
        %v502 = vld [vmem:[%s1 + $0x58] sm:$0xff]
        %v503 = vld [vmem:[%s1 + $0x60] sm:$0xff]
        %v504 = vld [vmem:[%s1 + $0x68] sm:$0xff]
        %v505 = vld [vmem:[%s1 + $0x70] sm:$0xff]
        %v506 = vld [vmem:[%s1 + $0x78] sm:$0xff]
        %v507 = vld [vmem:[%s2] sm:$0xff]
        %v508 = vld [vmem:[%s2 + $0x8] sm:$0xff]
        %v509 = vld [vmem:[%s2 + $0x10] sm:$0xff]
        %v510 = vld [vmem:[%s2 + $0x18] sm:$0xff]
        %v511 = vld [vmem:[%s2 + $0x20] sm:$0xff]
        %v512 = vld [vmem:[%s2 + $0x28] sm:$0xff]
        %v513 = vld [vmem:[%s2 + $0x30] sm:$0xff]
        %v514 = vld [vmem:[%s2 + $0x38] sm:$0xff]
        %v515 = vld [vmem:[%s2 + $0x40] sm:$0xff]
        %v516 = vld [vmem:[%s2 + $0x48] sm:$0xff]
        %v517 = vld [vmem:[%s2 + $0x50] sm:$0xff]
        %v518 = vld [vmem:[%s2 + $0x58] sm:$0xff]
        %v519 = vld [vmem:[%s2 + $0x60] sm:$0xff]
        %v520 = vld [vmem:[%s2 + $0x68] sm:$0xff]
        %v521 = vld [vmem:[%s2 + $0x70] sm:$0xff]
        %v522 = vld [vmem:[%s2 + $0x78] sm:$0xff]
        %524 = vset.pattern.permute.xlu0 0
        %525 = vperm.xlu0 %524, %v507
        %v526 = vpop.permute.xlu0 %525
        %529 = vset.pattern.permute.xlu0 0
        %530 = vperm.xlu0 %529, %v508
        %v531 = vpop.permute.xlu0 %530
        %534 = vset.pattern.permute.xlu0 0
        %535 = vperm.xlu0 %534, %v509
        %v536 = vpop.permute.xlu0 %535
        %539 = vset.pattern.permute.xlu0 0
        %540 = vperm.xlu0 %539, %v510
        %v541 = vpop.permute.xlu0 %540
        %544 = vset.pattern.permute.xlu0 0
        %545 = vperm.xlu0 %544, %v511
        %v546 = vpop.permute.xlu0 %545
        %549 = vset.pattern.permute.xlu0 0
        %550 = vperm.xlu0 %549, %v512
        %v551 = vpop.permute.xlu0 %550
        %554 = vset.pattern.permute.xlu0 0
        %555 = vperm.xlu0 %554, %v513
        %v556 = vpop.permute.xlu0 %555
        %559 = vset.pattern.permute.xlu0 0
        %560 = vperm.xlu0 %559, %v514
        %v561 = vpop.permute.xlu0 %560
        %564 = vset.pattern.permute.xlu0 0
        %565 = vperm.xlu0 %564, %v515
        %v566 = vpop.permute.xlu0 %565
        %569 = vset.pattern.permute.xlu0 0
        %570 = vperm.xlu0 %569, %v516
        %v571 = vpop.permute.xlu0 %570
        %574 = vset.pattern.permute.xlu0 0
        %575 = vperm.xlu0 %574, %v517
        %v576 = vpop.permute.xlu0 %575
        %579 = vset.pattern.permute.xlu0 0
        %580 = vperm.xlu0 %579, %v518
        %v581 = vpop.permute.xlu0 %580
        %584 = vset.pattern.permute.xlu0 0
        %585 = vperm.xlu0 %584, %v519
        %v586 = vpop.permute.xlu0 %585
        %589 = vset.pattern.permute.xlu0 0
        %590 = vperm.xlu0 %589, %v520
        %v591 = vpop.permute.xlu0 %590
        %594 = vset.pattern.permute.xlu0 0
        %595 = vperm.xlu0 %594, %v521
        %v596 = vpop.permute.xlu0 %595
        %599 = vset.pattern.permute.xlu0 0
        %600 = vperm.xlu0 %599, %v522
        %v601 = vpop.permute.xlu0 %600
        %v619 = vunpack.c.l.b16 %v491
        %v620 = vunpack.c.h.b16 %v491
        %v621 = vunpack.c.l.b16 %v492
        %v622 = vunpack.c.h.b16 %v492
        %v623 = vunpack.c.l.b16 %v493
        %v624 = vunpack.c.h.b16 %v493
        %v625 = vunpack.c.l.b16 %v494
        %v626 = vunpack.c.h.b16 %v494
        %v627 = vunpack.c.l.b16 %v495
        %v628 = vunpack.c.h.b16 %v495
        %v629 = vunpack.c.l.b16 %v496
        %v630 = vunpack.c.h.b16 %v496
        %v631 = vunpack.c.l.b16 %v497
        %v632 = vunpack.c.h.b16 %v497
        %v633 = vunpack.c.l.b16 %v498
        %v634 = vunpack.c.h.b16 %v498
        %v635 = vunpack.c.l.b16 %v499
        %v636 = vunpack.c.h.b16 %v499
        %v637 = vunpack.c.l.b16 %v500
        %v638 = vunpack.c.h.b16 %v500
        %v639 = vunpack.c.l.b16 %v501
        %v640 = vunpack.c.h.b16 %v501
        %v641 = vunpack.c.l.b16 %v502
        %v642 = vunpack.c.h.b16 %v502
        %v643 = vunpack.c.l.b16 %v503
        %v644 = vunpack.c.h.b16 %v503
        %v645 = vunpack.c.l.b16 %v504
        %v646 = vunpack.c.h.b16 %v504
        %v647 = vunpack.c.l.b16 %v505
        %v648 = vunpack.c.h.b16 %v505
        %v649 = vunpack.c.l.b16 %v506
        %v650 = vunpack.c.h.b16 %v506
        %v651 = vpack.c.b16 %v621, %v619
        %v652 = vpack.c.b16 %v622, %v620
        %v653 = vpack.c.b16 %v625, %v623
        %v654 = vpack.c.b16 %v626, %v624
        %v655 = vpack.c.b16 %v629, %v627
        %v656 = vpack.c.b16 %v630, %v628
        %v657 = vpack.c.b16 %v633, %v631
        %v658 = vpack.c.b16 %v634, %v632
        %v659 = vpack.c.b16 %v637, %v635
        %v660 = vpack.c.b16 %v638, %v636
        %v661 = vpack.c.b16 %v641, %v639
        %v662 = vpack.c.b16 %v642, %v640
        %v663 = vpack.c.b16 %v645, %v643
        %v664 = vpack.c.b16 %v646, %v644
        %v665 = vpack.c.b16 %v649, %v647
        %v666 = vpack.c.b16 %v650, %v648
        %679 = vrot.lane.b32.xlu0 %v434, 1
        %v680 = vpop.permute.xlu0 %679
        %681 = vrot.lane.b32.xlu0 %v435, 1
        %v682 = vpop.permute.xlu0 %681
        %683 = vrot.lane.b32.xlu0 %v436, 1
        %v684 = vpop.permute.xlu0 %683
        %685 = vrot.lane.b32.xlu0 %v437, 1
        %v686 = vpop.permute.xlu0 %685
        %687 = vrot.lane.b32.xlu0 %v438, 1
        %v688 = vpop.permute.xlu0 %687
        %689 = vrot.lane.b32.xlu0 %v439, 1
        %v690 = vpop.permute.xlu0 %689
        %691 = vrot.lane.b32.xlu0 %v440, 1
        %v692 = vpop.permute.xlu0 %691
        %693 = vrot.lane.b32.xlu0 %v441, 1
        %v694 = vpop.permute.xlu0 %693
        %695 = vrot.lane.b32.xlu0 %v455, 1
        %v696 = vpop.permute.xlu0 %695
        %697 = vrot.lane.b32.xlu0 %v457, 1
        %v698 = vpop.permute.xlu0 %697
        %699 = vrot.lane.b32.xlu0 %v459, 1
        %v700 = vpop.permute.xlu0 %699
        %701 = vrot.lane.b32.xlu0 %v461, 1
        %v702 = vpop.permute.xlu0 %701
        %703 = vrot.lane.b32.xlu0 %v471, 1
        %v704 = vpop.permute.xlu0 %703
        %705 = vrot.lane.b32.xlu0 %v487, 1
        %v706 = vpop.permute.xlu0 %705
        %707 = vrot.lane.b32.xlu0 %v475, 1
        %v708 = vpop.permute.xlu0 %707
        %709 = vrot.lane.b32.xlu0 %v488, 1
        %v710 = vpop.permute.xlu0 %709
        %711 = vrot.lane.b32.xlu0 %v479, 1
        %v712 = vpop.permute.xlu0 %711
        %713 = vrot.lane.b32.xlu0 %v489, 1
        %v714 = vpop.permute.xlu0 %713
        %715 = vrot.lane.b32.xlu0 %v483, 1
        %v716 = vpop.permute.xlu0 %715
        %717 = vrot.lane.b32.xlu0 %v490, 1
        %v718 = vpop.permute.xlu0 %717
        %vm719 = vcmask 7168
        %v720 = vsel %vm719, %v680, %v682
        %v721 = vsel %vm719, %v684, %v686
        %v722 = vsel %vm719, %v688, %v690
        %v723 = vsel %vm719, %v692, %v694
        %v724 = vsel %vm719, %v704, %v706
        %v725 = vsel %vm719, %v708, %v710
        %v726 = vsel %vm719, %v712, %v714
        %v727 = vsel %vm719, %v716, %v718
        %vm740 = vcmask 523264
        %v742 = vsel %vm740, %v652, 0
        %v745 = vsel %vm740, %v654, 0
        %v748 = vsel %vm740, %v656, 0
        %v751 = vsel %vm740, %v658, 0
        %v754 = vsel %vm740, %v660, 0
        %v757 = vsel %vm740, %v662, 0
        %v760 = vsel %vm740, %v664, 0
        %v763 = vsel %vm740, %v666, 0
        %765 = vmatprep.subr.bf16.mxu0 0
        %766 = vmatpush1.bf16.msra.mxu0 %v720
        %767 = vmatprep.subr.bf16.mxu0 0
        %768 = vmatpush1.bf16.msra.mxu0 %v721
        %769 = vmatprep.subr.bf16.mxu0 0
        %770 = vmatpush1.bf16.msra.mxu0 %v722
        %771 = vmatprep.subr.bf16.mxu0 0
        %772 = vmatpush1.bf16.msra.mxu0 %v723
        %773 = vmatprep.subr.bf16.mxu0 0
        %774 = vmatpush1.bf16.msra.mxu0 %v696
        %775 = vmatprep.subr.bf16.mxu0 0
        %776 = vmatpush1.bf16.msra.mxu0 %v698
        %777 = vmatprep.subr.bf16.mxu0 0
        %778 = vmatpush1.bf16.msra.mxu0 %v700
        %779 = vmatprep.subr.bf16.mxu0 0
        %780 = vmatpush1.bf16.msra.mxu0 %v702
        %781 = vmatprep.subr.bf16.mxu0 0
        %782 = vmatpush1.bf16.msra.mxu0 %v724
        %783 = vmatprep.subr.bf16.mxu0 0
        %784 = vmatpush1.bf16.msra.mxu0 %v725
        %785 = vmatprep.subr.bf16.mxu0 0
        %786 = vmatpush1.bf16.msra.mxu0 %v726
        %787 = vmatprep.subr.bf16.mxu0 0
        %788 = vmatpush1.bf16.msra.mxu0 %v727
        %789 = vmatprep.subr.bf16.mxu0 0
        %790 = vmatpush1.bf16.msra.mxu0 0
        %791 = vmatprep.subr.bf16.mxu0 0
        %792 = vmatpush1.bf16.msra.mxu0 0
        %793 = vmatprep.subr.bf16.mxu0 0
        %794 = vmatpush1.bf16.msra.mxu0 0
        %795 = vmatprep.subr.bf16.mxu0 0
        %796 = vmatpush1.bf16.msra.mxu0 0
        %797 = vmatprep.mubr.bf16.mxu0 %v742
        %798 = vmatmul.mubr.bf16.gmra.mrb[0].mxu0 %v651
        %v799 = vpop.f32.mrb[0].mxu0
        %v800 = vadd.f32 %v526, %v799
        %v801 = vpop.f32.mrb[0].mxu0
        %v802 = vpop.f32.mrb[0].mxu0
        %v803 = vadd.f32 %v531, %v802
        %v804 = vpop.f32.mrb[0].mxu0
        %805 = vmatprep.mubr.bf16.mxu0 %v745
        %806 = vmatmul.mubr.bf16.gmra.mrb[0].mxu0 %v653
        %v807 = vpop.f32.mrb[0].mxu0
        %v808 = vadd.f32 %v536, %v807
        %v809 = vpop.f32.mrb[0].mxu0
        %v810 = vpop.f32.mrb[0].mxu0
        %v811 = vadd.f32 %v541, %v810
        %v812 = vpop.f32.mrb[0].mxu0
        %813 = vmatprep.mubr.bf16.mxu0 %v748
        %814 = vmatmul.mubr.bf16.gmra.mrb[0].mxu0 %v655
        %v815 = vpop.f32.mrb[0].mxu0
        %v816 = vadd.f32 %v546, %v815
        %v817 = vpop.f32.mrb[0].mxu0
        %v818 = vpop.f32.mrb[0].mxu0
        %v819 = vadd.f32 %v551, %v818
        %v820 = vpop.f32.mrb[0].mxu0
        %821 = vmatprep.mubr.bf16.mxu0 %v751
        %822 = vmatmul.mubr.bf16.gmra.mrb[0].mxu0 %v657
        %v823 = vpop.f32.mrb[0].mxu0
        %v824 = vadd.f32 %v556, %v823
        %v825 = vpop.f32.mrb[0].mxu0
        %v826 = vpop.f32.mrb[0].mxu0
        %v827 = vadd.f32 %v561, %v826
        %v828 = vpop.f32.mrb[0].mxu0
        %829 = vmatprep.mubr.bf16.mxu0 %v754
        %830 = vmatmul.mubr.bf16.gmra.mrb[0].mxu0 %v659
        %v831 = vpop.f32.mrb[0].mxu0
        %v832 = vadd.f32 %v566, %v831
        %v833 = vpop.f32.mrb[0].mxu0
        %v834 = vpop.f32.mrb[0].mxu0
        %v835 = vadd.f32 %v571, %v834
        %v836 = vpop.f32.mrb[0].mxu0
        %837 = vmatprep.mubr.bf16.mxu0 %v757
        %838 = vmatmul.mubr.bf16.gmra.mrb[0].mxu0 %v661
        %v839 = vpop.f32.mrb[0].mxu0
        %v840 = vadd.f32 %v576, %v839
        %v841 = vpop.f32.mrb[0].mxu0
        %v842 = vpop.f32.mrb[0].mxu0
        %v843 = vadd.f32 %v581, %v842
        %v844 = vpop.f32.mrb[0].mxu0
        %845 = vmatprep.mubr.bf16.mxu0 %v760
        %846 = vmatmul.mubr.bf16.gmra.mrb[0].mxu0 %v663
        %v847 = vpop.f32.mrb[0].mxu0
        %v848 = vadd.f32 %v586, %v847
        %v849 = vpop.f32.mrb[0].mxu0
        %v850 = vpop.f32.mrb[0].mxu0
        %v851 = vadd.f32 %v591, %v850
        %v852 = vpop.f32.mrb[0].mxu0
        %853 = vmatprep.mubr.bf16.mxu0 %v763
        %854 = vmatmul.mubr.bf16.gmra.mrb[0].mxu0 %v665
        %v855 = vpop.f32.mrb[0].mxu0
        %v856 = vadd.f32 %v596, %v855
        %v857 = vpop.f32.mrb[0].mxu0
        %v858 = vpop.f32.mrb[0].mxu0
        %v859 = vadd.f32 %v601, %v858
        %v860 = vpop.f32.mrb[0].mxu0
        %861 = vdwg.mxu0
        %v862 = vmax.f32 %v800, 0.0
        %v863 = vmax.f32 %v803, 0.0
        %v864 = vmax.f32 %v808, 0.0
        %v865 = vmax.f32 %v811, 0.0
        %v866 = vmax.f32 %v816, 0.0
        %v867 = vmax.f32 %v819, 0.0
        %v868 = vmax.f32 %v824, 0.0
        %v869 = vmax.f32 %v827, 0.0
        %v870 = vmax.f32 %v832, 0.0
        %v871 = vmax.f32 %v835, 0.0
        %v872 = vmax.f32 %v840, 0.0
        %v873 = vmax.f32 %v843, 0.0
        %v874 = vmax.f32 %v848, 0.0
        %v875 = vmax.f32 %v851, 0.0
        %v876 = vmax.f32 %v856, 0.0
        %v877 = vmax.f32 %v859, 0.0
        %v878 = vpack.c.bf16 %v863, %v862
        %v879 = vpack.c.bf16 %v865, %v864
        %v880 = vpack.c.bf16 %v867, %v866
        %v881 = vpack.c.bf16 %v869, %v868
        %v882 = vpack.c.bf16 %v871, %v870
        %v883 = vpack.c.bf16 %v873, %v872
        %v884 = vpack.c.bf16 %v875, %v874
        %v885 = vpack.c.bf16 %v877, %v876
        %886 = vst [vmem:[#allocation3] sm:$0xff] 0
        %887 = vst [vmem:[#allocation3 + $0x8] sm:$0xff] 0
        %888 = vst [vmem:[#allocation3 + $0x10] sm:$0xff] 0
        %889 = vst [vmem:[#allocation3 + $0x18] sm:$0xff] 0
        %890 = vst [vmem:[#allocation3 + $0x20] sm:$0xff] 0
        %891 = vst [vmem:[#allocation3 + $0x28] sm:$0xff] 0
        %892 = vst [vmem:[#allocation3 + $0x30] sm:$0xff] 0
        %893 = vst [vmem:[#allocation3 + $0x38] sm:$0xff] 0
        %894 = vst [vmem:[#allocation3 + $0x40] sm:$0xff] 0
        %895 = vst [vmem:[#allocation3 + $0x48] sm:$0xff] 0
        %896 = vst [vmem:[#allocation3 + $0x50] sm:$0xff] 0
        %897 = vst [vmem:[#allocation3 + $0x58] sm:$0xff] 0
        %898 = vst [vmem:[#allocation3 + $0x60] sm:$0xff] 0
        %899 = vst [vmem:[#allocation3 + $0x68] sm:$0xff] 0
        %900 = vst [vmem:[#allocation3 + $0x70] sm:$0xff] 0
        %901 = vst [vmem:[#allocation3 + $0x78] sm:$0xff] 0
        %902 = vst [vmem:[#allocation3 + $0x80] sm:$0xff] 0
        %903 = vst [vmem:[#allocation3 + $0x88] sm:$0xff] 0
        %904 = vst [vmem:[#allocation3 + $0x90] sm:$0xff] 0
        %905 = vst [vmem:[#allocation3 + $0x98] sm:$0xff] 0
        %906 = vst [vmem:[#allocation3 + $0xa0] sm:$0xff] 0
        %907 = vst [vmem:[#allocation3 + $0xa8] sm:$0xff] 0
        %908 = vst [vmem:[#allocation3 + $0xb0] sm:$0xff] 0
        %909 = vst [vmem:[#allocation3 + $0xb8] sm:$0xff] 0
        %910 = vst [vmem:[#allocation3 + $0x8] sm:$0xff] %v878
        %911 = vst [vmem:[#allocation3 + $0x20] sm:$0xff] %v879
        %912 = vst [vmem:[#allocation3 + $0x38] sm:$0xff] %v880
        %913 = vst [vmem:[#allocation3 + $0x50] sm:$0xff] %v881
        %914 = vst [vmem:[#allocation3 + $0x68] sm:$0xff] %v882
        %915 = vst [vmem:[#allocation3 + $0x80] sm:$0xff] %v883
        %916 = vst [vmem:[#allocation3 + $0x98] sm:$0xff] %v884
        %917 = vst [vmem:[#allocation3 + $0xb0] sm:$0xff] %v885
        %v918 = vld [vmem:[#allocation3] sm:$0xff]
        %v919 = vld [vmem:[#allocation3 + $0x8] sm:$0xff]
        %v920 = vld [vmem:[#allocation3 + $0x18] sm:$0xff]
        %v921 = vld [vmem:[#allocation3 + $0x20] sm:$0xff]
        %v922 = vld [vmem:[#allocation3 + $0x30] sm:$0xff]
        %v923 = vld [vmem:[#allocation3 + $0x38] sm:$0xff]
        %v924 = vld [vmem:[#allocation3 + $0x48] sm:$0xff]
        %v925 = vld [vmem:[#allocation3 + $0x50] sm:$0xff]
        %v926 = vld [vmem:[#allocation3 + $0x60] sm:$0xff]
        %v927 = vld [vmem:[#allocation3 + $0x68] sm:$0xff]
        %v928 = vld [vmem:[#allocation3 + $0x78] sm:$0xff]
        %v929 = vld [vmem:[#allocation3 + $0x80] sm:$0xff]
        %v930 = vld [vmem:[#allocation3 + $0x90] sm:$0xff]
        %v931 = vld [vmem:[#allocation3 + $0x98] sm:$0xff]
        %v932 = vld [vmem:[#allocation3 + $0xa8] sm:$0xff]
        %v933 = vld [vmem:[#allocation3 + $0xb0] sm:$0xff]
        %v934 = vld [vmem:[#allocation3 + $0x8] sm:$0xff]
        %v935 = vld [vmem:[#allocation3 + $0x10] sm:$0xff]
        %v936 = vld [vmem:[#allocation3 + $0x20] sm:$0xff]
        %v937 = vld [vmem:[#allocation3 + $0x28] sm:$0xff]
        %v938 = vld [vmem:[#allocation3 + $0x38] sm:$0xff]
        %v939 = vld [vmem:[#allocation3 + $0x40] sm:$0xff]
        %v940 = vld [vmem:[#allocation3 + $0x50] sm:$0xff]
        %v941 = vld [vmem:[#allocation3 + $0x58] sm:$0xff]
        %v942 = vld [vmem:[#allocation3 + $0x68] sm:$0xff]
        %v943 = vld [vmem:[#allocation3 + $0x70] sm:$0xff]
        %v944 = vld [vmem:[#allocation3 + $0x80] sm:$0xff]
        %v945 = vld [vmem:[#allocation3 + $0x88] sm:$0xff]
        %v946 = vld [vmem:[#allocation3 + $0x98] sm:$0xff]
        %v947 = vld [vmem:[#allocation3 + $0xa0] sm:$0xff]
        %v948 = vld [vmem:[#allocation3 + $0xb0] sm:$0xff]
        %v949 = vld [vmem:[#allocation3 + $0xb8] sm:$0xff]
        %958 = vrot.lane.b32.xlu0 %v919, 127
        %v959 = vpop.permute.xlu0 %958
        %960 = vrot.lane.b32.xlu0 %v921, 127
        %v961 = vpop.permute.xlu0 %960
        %962 = vrot.lane.b32.xlu0 %v923, 127
        %v963 = vpop.permute.xlu0 %962
        %964 = vrot.lane.b32.xlu0 %v925, 127
        %v965 = vpop.permute.xlu0 %964
        %966 = vrot.lane.b32.xlu0 %v927, 127
        %v967 = vpop.permute.xlu0 %966
        %968 = vrot.lane.b32.xlu0 %v929, 127
        %v969 = vpop.permute.xlu0 %968
        %970 = vrot.lane.b32.xlu0 %v931, 127
        %v971 = vpop.permute.xlu0 %970
        %972 = vrot.lane.b32.xlu0 %v933, 127
        %v973 = vpop.permute.xlu0 %972
        %990 = vrot.lane.b32.xlu0 %v934, 126
        %v991 = vpop.permute.xlu0 %990
        %992 = vrot.lane.b32.xlu0 %v935, 126
        %v993 = vpop.permute.xlu0 %992
        %994 = vrot.lane.b32.xlu0 %v936, 126
        %v995 = vpop.permute.xlu0 %994
        %996 = vrot.lane.b32.xlu0 %v937, 126
        %v997 = vpop.permute.xlu0 %996
        %998 = vrot.lane.b32.xlu0 %v938, 126
        %v999 = vpop.permute.xlu0 %998
        %1000 = vrot.lane.b32.xlu0 %v939, 126
        %v1001 = vpop.permute.xlu0 %1000
        %1002 = vrot.lane.b32.xlu0 %v940, 126
        %v1003 = vpop.permute.xlu0 %1002
        %1004 = vrot.lane.b32.xlu0 %v941, 126
        %v1005 = vpop.permute.xlu0 %1004
        %1006 = vrot.lane.b32.xlu0 %v942, 126
        %v1007 = vpop.permute.xlu0 %1006
        %1008 = vrot.lane.b32.xlu0 %v943, 126
        %v1009 = vpop.permute.xlu0 %1008
        %1010 = vrot.lane.b32.xlu0 %v944, 126
        %v1011 = vpop.permute.xlu0 %1010
        %1012 = vrot.lane.b32.xlu0 %v945, 126
        %v1013 = vpop.permute.xlu0 %1012
        %1014 = vrot.lane.b32.xlu0 %v946, 126
        %v1015 = vpop.permute.xlu0 %1014
        %1016 = vrot.lane.b32.xlu0 %v947, 126
        %v1017 = vpop.permute.xlu0 %1016
        %1018 = vrot.lane.b32.xlu0 %v948, 126
        %v1019 = vpop.permute.xlu0 %1018
        %1020 = vrot.lane.b32.xlu0 %v949, 126
        %v1021 = vpop.permute.xlu0 %1020
        %v1022 = vsel %vm486, %v991, %v993
        %v1023 = vsel %vm486, %v995, %v997
        %v1024 = vsel %vm486, %v999, %v1001
        %v1025 = vsel %vm486, %v1003, %v1005
        %v1026 = vsel %vm486, %v1007, %v1009
        %v1027 = vsel %vm486, %v1011, %v1013
        %v1028 = vsel %vm486, %v1015, %v1017
        %v1029 = vsel %vm486, %v1019, %v1021
        %v1030 = vld [vmem:[%s3] sm:$0xff]
        %v1031 = vld [vmem:[%s3 + $0x8] sm:$0xf]
        %v1032 = vld [vmem:[%s3 + $0xc] sm:$0xff]
        %v1033 = vld [vmem:[%s3 + $0x14] sm:$0xf]
        %v1034 = vld [vmem:[%s3 + $0x18] sm:$0xff]
        %v1035 = vld [vmem:[%s3 + $0x20] sm:$0xf]
        %v1036 = vld [vmem:[%s3 + $0x24] sm:$0xff]
        %v1037 = vld [vmem:[%s3 + $0x2c] sm:$0xf]
        %v1038 = vld [vmem:[%s3 + $0x30] sm:$0xff]
        %v1039 = vld [vmem:[%s3 + $0x38] sm:$0xf]
        %v1040 = vld [vmem:[%s3 + $0x3c] sm:$0xff]
        %v1041 = vld [vmem:[%s3 + $0x44] sm:$0xf]
        %v1042 = vld [vmem:[%s3 + $0x48] sm:$0xff]
        %v1043 = vld [vmem:[%s3 + $0x50] sm:$0xf]
        %v1044 = vld [vmem:[%s3 + $0x54] sm:$0xff]
        %v1045 = vld [vmem:[%s3 + $0x5c] sm:$0xf]
        %v1046 = vld [vmem:[%s3 + $0x60] sm:$0xff]
        %v1047 = vld [vmem:[%s3 + $0x68] sm:$0xf]
        %v1048 = vld [vmem:[%s3 + $0x6c] sm:$0xff]
        %v1049 = vld [vmem:[%s3 + $0x74] sm:$0xf]
        %v1050 = vld [vmem:[%s3 + $0x78] sm:$0xff]
        %v1051 = vld [vmem:[%s3 + $0x80] sm:$0xf]
        %v1052 = vld [vmem:[%s3 + $0x84] sm:$0xff]
        %v1053 = vld [vmem:[%s3 + $0x8c] sm:$0xf]
        %v1054 = vld [vmem:[%s3 + $0x90] sm:$0xff]
        %v1055 = vld [vmem:[%s3 + $0x98] sm:$0xf]
        %v1056 = vld [vmem:[%s3 + $0x9c] sm:$0xff]
        %v1057 = vld [vmem:[%s3 + $0xa4] sm:$0xf]
        %v1058 = vld [vmem:[%s3 + $0xa8] sm:$0xff]
        %v1059 = vld [vmem:[%s3 + $0xb0] sm:$0xf]
        %v1060 = vld [vmem:[%s3 + $0xb4] sm:$0xff]
        %v1061 = vld [vmem:[%s3 + $0xbc] sm:$0xf]
        %v1062 = vld [vmem:[%s4] sm:$0xff]
        %v1063 = vld [vmem:[%s4 + $0x8] sm:$0xff]
        %v1064 = vld [vmem:[%s4 + $0x10] sm:$0xff]
        %v1065 = vld [vmem:[%s4 + $0x18] sm:$0xff]
        %v1066 = vld [vmem:[%s4 + $0x20] sm:$0xff]
        %v1067 = vld [vmem:[%s4 + $0x28] sm:$0xff]
        %v1068 = vld [vmem:[%s4 + $0x30] sm:$0xff]
        %v1069 = vld [vmem:[%s4 + $0x38] sm:$0xff]
        %v1070 = vld [vmem:[%s4 + $0x40] sm:$0xff]
        %v1071 = vld [vmem:[%s4 + $0x48] sm:$0xff]
        %v1072 = vld [vmem:[%s4 + $0x50] sm:$0xff]
        %v1073 = vld [vmem:[%s4 + $0x58] sm:$0xff]
        %v1074 = vld [vmem:[%s4 + $0x60] sm:$0xff]
        %v1075 = vld [vmem:[%s4 + $0x68] sm:$0xff]
        %v1076 = vld [vmem:[%s4 + $0x70] sm:$0xff]
        %v1077 = vld [vmem:[%s4 + $0x78] sm:$0xff]
        %1079 = vset.pattern.permute.xlu0 0
        %1080 = vperm.xlu0 %1079, %v1062
        %v1081 = vpop.permute.xlu0 %1080
        %1084 = vset.pattern.permute.xlu0 0
        %1085 = vperm.xlu0 %1084, %v1063
        %v1086 = vpop.permute.xlu0 %1085
        %1089 = vset.pattern.permute.xlu0 0
        %1090 = vperm.xlu0 %1089, %v1064
        %v1091 = vpop.permute.xlu0 %1090
        %1094 = vset.pattern.permute.xlu0 0
        %1095 = vperm.xlu0 %1094, %v1065
        %v1096 = vpop.permute.xlu0 %1095
        %1099 = vset.pattern.permute.xlu0 0
        %1100 = vperm.xlu0 %1099, %v1066
        %v1101 = vpop.permute.xlu0 %1100
        %1104 = vset.pattern.permute.xlu0 0
        %1105 = vperm.xlu0 %1104, %v1067
        %v1106 = vpop.permute.xlu0 %1105
        %1109 = vset.pattern.permute.xlu0 0
        %1110 = vperm.xlu0 %1109, %v1068
        %v1111 = vpop.permute.xlu0 %1110
        %1114 = vset.pattern.permute.xlu0 0
        %1115 = vperm.xlu0 %1114, %v1069
        %v1116 = vpop.permute.xlu0 %1115
        %1119 = vset.pattern.permute.xlu0 0
        %1120 = vperm.xlu0 %1119, %v1070
        %v1121 = vpop.permute.xlu0 %1120
        %1124 = vset.pattern.permute.xlu0 0
        %1125 = vperm.xlu0 %1124, %v1071
        %v1126 = vpop.permute.xlu0 %1125
        %1129 = vset.pattern.permute.xlu0 0
        %1130 = vperm.xlu0 %1129, %v1072
        %v1131 = vpop.permute.xlu0 %1130
        %1134 = vset.pattern.permute.xlu0 0
        %1135 = vperm.xlu0 %1134, %v1073
        %v1136 = vpop.permute.xlu0 %1135
        %1139 = vset.pattern.permute.xlu0 0
        %1140 = vperm.xlu0 %1139, %v1074
        %v1141 = vpop.permute.xlu0 %1140
        %1144 = vset.pattern.permute.xlu0 0
        %1145 = vperm.xlu0 %1144, %v1075
        %v1146 = vpop.permute.xlu0 %1145
        %1149 = vset.pattern.permute.xlu0 0
        %1150 = vperm.xlu0 %1149, %v1076
        %v1151 = vpop.permute.xlu0 %1150
        %1154 = vset.pattern.permute.xlu0 0
        %1155 = vperm.xlu0 %1154, %v1077
        %v1156 = vpop.permute.xlu0 %1155
        %v1190 = vunpack.c.l.b16 %v1030
        %v1191 = vunpack.c.h.b16 %v1030
        %v1192 = vunpack.c.l.b16 %v1031
        %v1193 = vunpack.c.l.b16 %v1032
        %v1194 = vunpack.c.h.b16 %v1032
        %v1195 = vunpack.c.l.b16 %v1033
        %v1196 = vunpack.c.l.b16 %v1034
        %v1197 = vunpack.c.h.b16 %v1034
        %v1198 = vunpack.c.l.b16 %v1035
        %v1199 = vunpack.c.l.b16 %v1036
        %v1200 = vunpack.c.h.b16 %v1036
        %v1201 = vunpack.c.l.b16 %v1037
        %v1202 = vunpack.c.l.b16 %v1038
        %v1203 = vunpack.c.h.b16 %v1038
        %v1204 = vunpack.c.l.b16 %v1039
        %v1205 = vunpack.c.l.b16 %v1040
        %v1206 = vunpack.c.h.b16 %v1040
        %v1207 = vunpack.c.l.b16 %v1041
        %v1208 = vunpack.c.l.b16 %v1042
        %v1209 = vunpack.c.h.b16 %v1042
        %v1210 = vunpack.c.l.b16 %v1043
        %v1211 = vunpack.c.l.b16 %v1044
        %v1212 = vunpack.c.h.b16 %v1044
        %v1213 = vunpack.c.l.b16 %v1045
        %v1214 = vunpack.c.l.b16 %v1046
        %v1215 = vunpack.c.h.b16 %v1046
        %v1216 = vunpack.c.l.b16 %v1047
        %v1217 = vunpack.c.l.b16 %v1048
        %v1218 = vunpack.c.h.b16 %v1048
        %v1219 = vunpack.c.l.b16 %v1049
        %v1220 = vunpack.c.l.b16 %v1050
        %v1221 = vunpack.c.h.b16 %v1050
        %v1222 = vunpack.c.l.b16 %v1051
        %v1223 = vunpack.c.l.b16 %v1052
        %v1224 = vunpack.c.h.b16 %v1052
        %v1225 = vunpack.c.l.b16 %v1053
        %v1226 = vunpack.c.l.b16 %v1054
        %v1227 = vunpack.c.h.b16 %v1054
        %v1228 = vunpack.c.l.b16 %v1055
        %v1229 = vunpack.c.l.b16 %v1056
        %v1230 = vunpack.c.h.b16 %v1056
        %v1231 = vunpack.c.l.b16 %v1057
        %v1232 = vunpack.c.l.b16 %v1058
        %v1233 = vunpack.c.h.b16 %v1058
        %v1234 = vunpack.c.l.b16 %v1059
        %v1235 = vunpack.c.l.b16 %v1060
        %v1236 = vunpack.c.h.b16 %v1060
        %v1237 = vunpack.c.l.b16 %v1061
        %v1238 = vpack.c.b16 %v1193, %v1190
        %v1239 = vpack.c.b16 %v1194, %v1191
        %v1240 = vpack.c.b16 %v1195, %v1192
        %v1241 = vpack.c.b16 %v1199, %v1196
        %v1242 = vpack.c.b16 %v1200, %v1197
        %v1243 = vpack.c.b16 %v1201, %v1198
        %v1244 = vpack.c.b16 %v1205, %v1202
        %v1245 = vpack.c.b16 %v1206, %v1203
        %v1246 = vpack.c.b16 %v1207, %v1204
        %v1247 = vpack.c.b16 %v1211, %v1208
        %v1248 = vpack.c.b16 %v1212, %v1209
        %v1249 = vpack.c.b16 %v1213, %v1210
        %v1250 = vpack.c.b16 %v1217, %v1214
        %v1251 = vpack.c.b16 %v1218, %v1215
        %v1252 = vpack.c.b16 %v1219, %v1216
        %v1253 = vpack.c.b16 %v1223, %v1220
        %v1254 = vpack.c.b16 %v1224, %v1221
        %v1255 = vpack.c.b16 %v1225, %v1222
        %v1256 = vpack.c.b16 %v1229, %v1226
        %v1257 = vpack.c.b16 %v1230, %v1227
        %v1258 = vpack.c.b16 %v1231, %v1228
        %v1259 = vpack.c.b16 %v1235, %v1232
        %v1260 = vpack.c.b16 %v1236, %v1233
        %v1261 = vpack.c.b16 %v1237, %v1234
        %1294 = vrot.lane.b32.xlu0 %v918, 1
        %v1295 = vpop.permute.xlu0 %1294
        %1296 = vrot.lane.b32.xlu0 %v919, 1
        %v1297 = vpop.permute.xlu0 %1296
        %1298 = vrot.lane.b32.xlu0 %v920, 1
        %v1299 = vpop.permute.xlu0 %1298
        %1300 = vrot.lane.b32.xlu0 %v921, 1
        %v1301 = vpop.permute.xlu0 %1300
        %1302 = vrot.lane.b32.xlu0 %v922, 1
        %v1303 = vpop.permute.xlu0 %1302
        %1304 = vrot.lane.b32.xlu0 %v923, 1
        %v1305 = vpop.permute.xlu0 %1304
        %1306 = vrot.lane.b32.xlu0 %v924, 1
        %v1307 = vpop.permute.xlu0 %1306
        %1308 = vrot.lane.b32.xlu0 %v925, 1
        %v1309 = vpop.permute.xlu0 %1308
        %1310 = vrot.lane.b32.xlu0 %v926, 1
        %v1311 = vpop.permute.xlu0 %1310
        %1312 = vrot.lane.b32.xlu0 %v927, 1
        %v1313 = vpop.permute.xlu0 %1312
        %1314 = vrot.lane.b32.xlu0 %v928, 1
        %v1315 = vpop.permute.xlu0 %1314
        %1316 = vrot.lane.b32.xlu0 %v929, 1
        %v1317 = vpop.permute.xlu0 %1316
        %1318 = vrot.lane.b32.xlu0 %v930, 1
        %v1319 = vpop.permute.xlu0 %1318
        %1320 = vrot.lane.b32.xlu0 %v931, 1
        %v1321 = vpop.permute.xlu0 %1320
        %1322 = vrot.lane.b32.xlu0 %v932, 1
        %v1323 = vpop.permute.xlu0 %1322
        %1324 = vrot.lane.b32.xlu0 %v933, 1
        %v1325 = vpop.permute.xlu0 %1324
        %1326 = vrot.lane.b32.xlu0 %v959, 1
        %v1327 = vpop.permute.xlu0 %1326
        %1328 = vrot.lane.b32.xlu0 %v961, 1
        %v1329 = vpop.permute.xlu0 %1328
        %1330 = vrot.lane.b32.xlu0 %v963, 1
        %v1331 = vpop.permute.xlu0 %1330
        %1332 = vrot.lane.b32.xlu0 %v965, 1
        %v1333 = vpop.permute.xlu0 %1332
        %1334 = vrot.lane.b32.xlu0 %v967, 1
        %v1335 = vpop.permute.xlu0 %1334
        %1336 = vrot.lane.b32.xlu0 %v969, 1
        %v1337 = vpop.permute.xlu0 %1336
        %1338 = vrot.lane.b32.xlu0 %v971, 1
        %v1339 = vpop.permute.xlu0 %1338
        %1340 = vrot.lane.b32.xlu0 %v973, 1
        %v1341 = vpop.permute.xlu0 %1340
        %1342 = vrot.lane.b32.xlu0 %v991, 1
        %v1343 = vpop.permute.xlu0 %1342
        %1344 = vrot.lane.b32.xlu0 %v1022, 1
        %v1345 = vpop.permute.xlu0 %1344
        %1346 = vrot.lane.b32.xlu0 %v995, 1
        %v1347 = vpop.permute.xlu0 %1346
        %1348 = vrot.lane.b32.xlu0 %v1023, 1
        %v1349 = vpop.permute.xlu0 %1348
        %1350 = vrot.lane.b32.xlu0 %v999, 1
        %v1351 = vpop.permute.xlu0 %1350
        %1352 = vrot.lane.b32.xlu0 %v1024, 1
        %v1353 = vpop.permute.xlu0 %1352
        %1354 = vrot.lane.b32.xlu0 %v1003, 1
        %v1355 = vpop.permute.xlu0 %1354
        %1356 = vrot.lane.b32.xlu0 %v1025, 1
        %v1357 = vpop.permute.xlu0 %1356
        %1358 = vrot.lane.b32.xlu0 %v1007, 1
        %v1359 = vpop.permute.xlu0 %1358
        %1360 = vrot.lane.b32.xlu0 %v1026, 1
        %v1361 = vpop.permute.xlu0 %1360
        %1362 = vrot.lane.b32.xlu0 %v1011, 1
        %v1363 = vpop.permute.xlu0 %1362
        %1364 = vrot.lane.b32.xlu0 %v1027, 1
        %v1365 = vpop.permute.xlu0 %1364
        %1366 = vrot.lane.b32.xlu0 %v1015, 1
        %v1367 = vpop.permute.xlu0 %1366
        %1368 = vrot.lane.b32.xlu0 %v1028, 1
        %v1369 = vpop.permute.xlu0 %1368
        %1370 = vrot.lane.b32.xlu0 %v1019, 1
        %v1371 = vpop.permute.xlu0 %1370
        %1372 = vrot.lane.b32.xlu0 %v1029, 1
        %v1373 = vpop.permute.xlu0 %1372
        %v1374 = vsel %vm719, %v1295, %v1297
        %v1375 = vsel %vm719, %v1299, %v1301
        %v1376 = vsel %vm719, %v1303, %v1305
        %v1377 = vsel %vm719, %v1307, %v1309
        %v1378 = vsel %vm719, %v1311, %v1313
        %v1379 = vsel %vm719, %v1315, %v1317
        %v1380 = vsel %vm719, %v1319, %v1321
        %v1381 = vsel %vm719, %v1323, %v1325
        %v1382 = vsel %vm719, %v1343, %v1345
        %v1383 = vsel %vm719, %v1347, %v1349
        %v1384 = vsel %vm719, %v1351, %v1353
        %v1385 = vsel %vm719, %v1355, %v1357
        %v1386 = vsel %vm719, %v1359, %v1361
        %v1387 = vsel %vm719, %v1363, %v1365
        %v1388 = vsel %vm719, %v1367, %v1369
        %v1389 = vsel %vm719, %v1371, %v1373
        %1414 = vmatprep.subr.bf16.mxu0 0
        %1415 = vmatpush1.bf16.msra.mxu0 %v1374
        %1416 = vmatprep.subr.bf16.mxu0 0
        %1417 = vmatpush1.bf16.msra.mxu0 %v1375
        %1418 = vmatprep.subr.bf16.mxu0 0
        %1419 = vmatpush1.bf16.msra.mxu0 %v1376
        %1420 = vmatprep.subr.bf16.mxu0 0
        %1421 = vmatpush1.bf16.msra.mxu0 %v1377
        %1422 = vmatprep.subr.bf16.mxu0 0
        %1423 = vmatpush1.bf16.msra.mxu0 %v1378
        %1424 = vmatprep.subr.bf16.mxu0 0
        %1425 = vmatpush1.bf16.msra.mxu0 %v1379
        %1426 = vmatprep.subr.bf16.mxu0 0
        %1427 = vmatpush1.bf16.msra.mxu0 %v1380
        %1428 = vmatprep.subr.bf16.mxu0 0
        %1429 = vmatpush1.bf16.msra.mxu0 %v1381
        %1430 = vmatprep.subr.bf16.mxu0 0
        %1431 = vmatpush1.bf16.msra.mxu0 %v1327
        %1432 = vmatprep.subr.bf16.mxu0 0
        %1433 = vmatpush1.bf16.msra.mxu0 %v1329
        %1434 = vmatprep.subr.bf16.mxu0 0
        %1435 = vmatpush1.bf16.msra.mxu0 %v1331
        %1436 = vmatprep.subr.bf16.mxu0 0
        %1437 = vmatpush1.bf16.msra.mxu0 %v1333
        %1438 = vmatprep.subr.bf16.mxu0 0
        %1439 = vmatpush1.bf16.msra.mxu0 %v1335
        %1440 = vmatprep.subr.bf16.mxu0 0
        %1441 = vmatpush1.bf16.msra.mxu0 %v1337
        %1442 = vmatprep.subr.bf16.mxu0 0
        %1443 = vmatpush1.bf16.msra.mxu0 %v1339
        %1444 = vmatprep.subr.bf16.mxu0 0
        %1445 = vmatpush1.bf16.msra.mxu0 %v1341
        %1446 = vmatprep.mubr.bf16.mxu0 %v1239
        %1447 = vmatmul.mubr.bf16.gmra.mrb[0].mxu0 %v1238
        %v1448 = vpop.f32.mrb[0].mxu0
        %v1449 = vadd.f32 %v1081, %v1448
        %v1450 = vpop.f32.mrb[0].mxu0
        %v1451 = vpop.f32.mrb[0].mxu0
        %v1452 = vadd.f32 %v1086, %v1451
        %v1453 = vpop.f32.mrb[0].mxu0
        %1454 = vmatprep.mubr.bf16.mxu0 %v1242
        %1455 = vmatmul.mubr.bf16.gmra.mrb[0].mxu0 %v1241
        %v1456 = vpop.f32.mrb[0].mxu0
        %v1457 = vadd.f32 %v1091, %v1456
        %v1458 = vpop.f32.mrb[0].mxu0
        %v1459 = vpop.f32.mrb[0].mxu0
        %v1460 = vadd.f32 %v1096, %v1459
        %v1461 = vpop.f32.mrb[0].mxu0
        %1462 = vmatprep.mubr.bf16.mxu0 %v1245
        %1463 = vmatmul.mubr.bf16.gmra.mrb[0].mxu0 %v1244
        %v1464 = vpop.f32.mrb[0].mxu0
        %v1465 = vadd.f32 %v1101, %v1464
        %v1466 = vpop.f32.mrb[0].mxu0
        %v1467 = vpop.f32.mrb[0].mxu0
        %v1468 = vadd.f32 %v1106, %v1467
        %v1469 = vpop.f32.mrb[0].mxu0
        %1470 = vmatprep.mubr.bf16.mxu0 %v1248
        %1471 = vmatmul.mubr.bf16.gmra.mrb[0].mxu0 %v1247
        %v1472 = vpop.f32.mrb[0].mxu0
        %v1473 = vadd.f32 %v1111, %v1472
        %v1474 = vpop.f32.mrb[0].mxu0
        %v1475 = vpop.f32.mrb[0].mxu0
        %v1476 = vadd.f32 %v1116, %v1475
        %v1477 = vpop.f32.mrb[0].mxu0
        %1478 = vmatprep.mubr.bf16.mxu0 %v1251
        %1479 = vmatmul.mubr.bf16.gmra.mrb[0].mxu0 %v1250
        %v1480 = vpop.f32.mrb[0].mxu0
        %v1481 = vadd.f32 %v1121, %v1480
        %v1482 = vpop.f32.mrb[0].mxu0
        %v1483 = vpop.f32.mrb[0].mxu0
        %v1484 = vadd.f32 %v1126, %v1483
        %v1485 = vpop.f32.mrb[0].mxu0
        %1486 = vmatprep.mubr.bf16.mxu0 %v1254
        %1487 = vmatmul.mubr.bf16.gmra.mrb[0].mxu0 %v1253
        %v1488 = vpop.f32.mrb[0].mxu0
        %v1489 = vadd.f32 %v1131, %v1488
        %v1490 = vpop.f32.mrb[0].mxu0
        %v1491 = vpop.f32.mrb[0].mxu0
        %v1492 = vadd.f32 %v1136, %v1491
        %v1493 = vpop.f32.mrb[0].mxu0
        %1494 = vmatprep.mubr.bf16.mxu0 %v1257
        %1495 = vmatmul.mubr.bf16.gmra.mrb[0].mxu0 %v1256
        %v1496 = vpop.f32.mrb[0].mxu0
        %v1497 = vadd.f32 %v1141, %v1496
        %v1498 = vpop.f32.mrb[0].mxu0
        %v1499 = vpop.f32.mrb[0].mxu0
        %v1500 = vadd.f32 %v1146, %v1499
        %v1501 = vpop.f32.mrb[0].mxu0
        %1502 = vmatprep.mubr.bf16.mxu0 %v1260
        %1503 = vmatmul.mubr.bf16.gmra.mrb[0].mxu0 %v1259
        %v1504 = vpop.f32.mrb[0].mxu0
        %v1505 = vadd.f32 %v1151, %v1504
        %v1506 = vpop.f32.mrb[0].mxu0
        %v1507 = vpop.f32.mrb[0].mxu0
        %v1508 = vadd.f32 %v1156, %v1507
        %v1509 = vpop.f32.mrb[0].mxu0
        %1510 = vdwg.mxu0
        %1511 = vmatprep.subr.bf16.mxu0 0
        %1512 = vmatpush1.bf16.msra.mxu0 %v1382
        %1513 = vmatprep.subr.bf16.mxu0 0
        %1514 = vmatpush1.bf16.msra.mxu0 %v1383
        %1515 = vmatprep.subr.bf16.mxu0 0
        %1516 = vmatpush1.bf16.msra.mxu0 %v1384
        %1517 = vmatprep.subr.bf16.mxu0 0
        %1518 = vmatpush1.bf16.msra.mxu0 %v1385
        %1519 = vmatprep.subr.bf16.mxu0 0
        %1520 = vmatpush1.bf16.msra.mxu0 %v1386
        %1521 = vmatprep.subr.bf16.mxu0 0
        %1522 = vmatpush1.bf16.msra.mxu0 %v1387
        %1523 = vmatprep.subr.bf16.mxu0 0
        %1524 = vmatpush1.bf16.msra.mxu0 %v1388
        %1525 = vmatprep.subr.bf16.mxu0 0
        %1526 = vmatpush1.bf16.msra.mxu0 %v1389
        %1527 = vmatprep.subr.bf16.mxu0 0
        %1528 = vmatpush1.bf16.msra.mxu0 0
        %1529 = vmatprep.subr.bf16.mxu0 0
        %1530 = vmatpush1.bf16.msra.mxu0 0
        %1531 = vmatprep.subr.bf16.mxu0 0
        %1532 = vmatpush1.bf16.msra.mxu0 0
        %1533 = vmatprep.subr.bf16.mxu0 0
        %1534 = vmatpush1.bf16.msra.mxu0 0
        %1535 = vmatprep.subr.bf16.mxu0 0
        %1536 = vmatpush1.bf16.msra.mxu0 0
        %1537 = vmatprep.subr.bf16.mxu0 0
        %1538 = vmatpush1.bf16.msra.mxu0 0
        %1539 = vmatprep.subr.bf16.mxu0 0
        %1540 = vmatpush1.bf16.msra.mxu0 0
        %1541 = vmatprep.subr.bf16.mxu0 0
        %1542 = vmatpush1.bf16.msra.mxu0 0
        %1543 = vmatprep.mubr.bf16.mxu0 0
        %1544 = vmatmul.mubr.bf16.gmra.mrb[0].mxu0 %v1240
        %v1545 = vpop.f32.mrb[0].mxu0
        %v1546 = vadd.f32 %v1449, %v1545
        %v1547 = vpop.f32.mrb[0].mxu0
        %v1548 = vpop.f32.mrb[0].mxu0
        %v1549 = vadd.f32 %v1452, %v1548
        %v1550 = vpop.f32.mrb[0].mxu0
        %1551 = vmatprep.mubr.bf16.mxu0 0
        %1552 = vmatmul.mubr.bf16.gmra.mrb[0].mxu0 %v1243
        %v1553 = vpop.f32.mrb[0].mxu0
        %v1554 = vadd.f32 %v1457, %v1553
        %v1555 = vpop.f32.mrb[0].mxu0
        %v1556 = vpop.f32.mrb[0].mxu0
        %v1557 = vadd.f32 %v1460, %v1556
        %v1558 = vpop.f32.mrb[0].mxu0
        %1559 = vmatprep.mubr.bf16.mxu0 0
        %1560 = vmatmul.mubr.bf16.gmra.mrb[0].mxu0 %v1246
        %v1561 = vpop.f32.mrb[0].mxu0
        %v1562 = vadd.f32 %v1465, %v1561
        %v1563 = vpop.f32.mrb[0].mxu0
        %v1564 = vpop.f32.mrb[0].mxu0
        %v1565 = vadd.f32 %v1468, %v1564
        %v1566 = vpop.f32.mrb[0].mxu0
        %1567 = vmatprep.mubr.bf16.mxu0 0
        %1568 = vmatmul.mubr.bf16.gmra.mrb[0].mxu0 %v1249
        %v1569 = vpop.f32.mrb[0].mxu0
        %v1570 = vadd.f32 %v1473, %v1569
        %v1571 = vpop.f32.mrb[0].mxu0
        %v1572 = vpop.f32.mrb[0].mxu0
        %v1573 = vadd.f32 %v1476, %v1572
        %v1574 = vpop.f32.mrb[0].mxu0
        %1575 = vmatprep.mubr.bf16.mxu0 0
        %1576 = vmatmul.mubr.bf16.gmra.mrb[0].mxu0 %v1252
        %v1577 = vpop.f32.mrb[0].mxu0
        %v1578 = vadd.f32 %v1481, %v1577
        %v1579 = vpop.f32.mrb[0].mxu0
        %v1580 = vpop.f32.mrb[0].mxu0
        %v1581 = vadd.f32 %v1484, %v1580
        %v1582 = vpop.f32.mrb[0].mxu0
        %1583 = vmatprep.mubr.bf16.mxu0 0
        %1584 = vmatmul.mubr.bf16.gmra.mrb[0].mxu0 %v1255
        %v1585 = vpop.f32.mrb[0].mxu0
        %v1586 = vadd.f32 %v1489, %v1585
        %v1587 = vpop.f32.mrb[0].mxu0
        %v1588 = vpop.f32.mrb[0].mxu0
        %v1589 = vadd.f32 %v1492, %v1588
        %v1590 = vpop.f32.mrb[0].mxu0
        %1591 = vmatprep.mubr.bf16.mxu0 0
        %1592 = vmatmul.mubr.bf16.gmra.mrb[0].mxu0 %v1258
        %v1593 = vpop.f32.mrb[0].mxu0
        %v1594 = vadd.f32 %v1497, %v1593
        %v1595 = vpop.f32.mrb[0].mxu0
        %v1596 = vpop.f32.mrb[0].mxu0
        %v1597 = vadd.f32 %v1500, %v1596
        %v1598 = vpop.f32.mrb[0].mxu0
        %1599 = vmatprep.mubr.bf16.mxu0 0
        %1600 = vmatmul.mubr.bf16.gmra.mrb[0].mxu0 %v1261
        %v1601 = vpop.f32.mrb[0].mxu0
        %v1602 = vadd.f32 %v1505, %v1601
        %v1603 = vpop.f32.mrb[0].mxu0
        %v1604 = vpop.f32.mrb[0].mxu0
        %v1605 = vadd.f32 %v1508, %v1604
        %v1606 = vpop.f32.mrb[0].mxu0
        %1607 = vdwg.mxu0
        %1608 = vadd.xlane.f32.xlu0 %v1546
        %v1609 = vpop.xlane.xlu0 %1608
        %1610 = vadd.xlane.f32.xlu0 %v1549
        %v1611 = vpop.xlane.xlu0 %1610
        %1612 = vadd.xlane.f32.xlu0 %v1554
        %v1613 = vpop.xlane.xlu0 %1612
        %1614 = vadd.xlane.f32.xlu0 %v1557
        %v1615 = vpop.xlane.xlu0 %1614
        %1616 = vadd.xlane.f32.xlu0 %v1562
        %v1617 = vpop.xlane.xlu0 %1616
        %1618 = vadd.xlane.f32.xlu0 %v1565
        %v1619 = vpop.xlane.xlu0 %1618
        %1620 = vadd.xlane.f32.xlu0 %v1570
        %v1621 = vpop.xlane.xlu0 %1620
        %1622 = vadd.xlane.f32.xlu0 %v1573
        %v1623 = vpop.xlane.xlu0 %1622
        %1624 = vadd.xlane.f32.xlu0 %v1578
        %v1625 = vpop.xlane.xlu0 %1624
        %1626 = vadd.xlane.f32.xlu0 %v1581
        %v1627 = vpop.xlane.xlu0 %1626
        %1628 = vadd.xlane.f32.xlu0 %v1586
        %v1629 = vpop.xlane.xlu0 %1628
        %1630 = vadd.xlane.f32.xlu0 %v1589
        %v1631 = vpop.xlane.xlu0 %1630
        %1632 = vadd.xlane.f32.xlu0 %v1594
        %v1633 = vpop.xlane.xlu0 %1632
        %1634 = vadd.xlane.f32.xlu0 %v1597
        %v1635 = vpop.xlane.xlu0 %1634
        %1636 = vadd.xlane.f32.xlu0 %v1602
        %v1637 = vpop.xlane.xlu0 %1636
        %1638 = vadd.xlane.f32.xlu0 %v1605
        %v1639 = vpop.xlane.xlu0 %1638
        %v1640 = vrcp.pop 128.0
        %v1641 = vmul.f32 %v1609, %v1640
        %v1642 = vmul.f32 %v1611, %v1640
        %v1643 = vmul.f32 %v1613, %v1640
        %v1644 = vmul.f32 %v1615, %v1640
        %v1645 = vmul.f32 %v1617, %v1640
        %v1646 = vmul.f32 %v1619, %v1640
        %v1647 = vmul.f32 %v1621, %v1640
        %v1648 = vmul.f32 %v1623, %v1640
        %v1649 = vmul.f32 %v1625, %v1640
        %v1650 = vmul.f32 %v1627, %v1640
        %v1651 = vmul.f32 %v1629, %v1640
        %v1652 = vmul.f32 %v1631, %v1640
        %v1653 = vmul.f32 %v1633, %v1640
        %v1654 = vmul.f32 %v1635, %v1640
        %v1655 = vmul.f32 %v1637, %v1640
        %v1656 = vmul.f32 %v1639, %v1640
        %v1657 = vld [vmem:[%s7] sm:$0xff]
        %v1658 = vld [vmem:[%s7 + $0x8] sm:$0xff]
        %v1659 = vld [vmem:[%s7 + $0x10] sm:$0xff]
        %v1660 = vld [vmem:[%s7 + $0x18] sm:$0xff]
        %v1661 = vld [vmem:[%s7 + $0x20] sm:$0xff]
        %v1662 = vld [vmem:[%s7 + $0x28] sm:$0xff]
        %v1663 = vld [vmem:[%s7 + $0x30] sm:$0xff]
        %v1664 = vld [vmem:[%s7 + $0x38] sm:$0xff]
        %v1665 = vld [vmem:[%s7 + $0x40] sm:$0xff]
        %v1666 = vld [vmem:[%s7 + $0x48] sm:$0xff]
        %v1667 = vld [vmem:[%s7 + $0x50] sm:$0xff]
        %v1668 = vld [vmem:[%s7 + $0x58] sm:$0xff]
        %v1669 = vld [vmem:[%s7 + $0x60] sm:$0xff]
        %v1670 = vld [vmem:[%s7 + $0x68] sm:$0xff]
        %v1671 = vld [vmem:[%s7 + $0x70] sm:$0xff]
        %v1672 = vld [vmem:[%s7 + $0x78] sm:$0xff]
        %v1673 = vmul.f32 %v1657, %v1641
        %v1674 = vmul.f32 %v1658, %v1642
        %v1675 = vmul.f32 %v1659, %v1643
        %v1676 = vmul.f32 %v1660, %v1644
        %v1677 = vmul.f32 %v1661, %v1645
        %v1678 = vmul.f32 %v1662, %v1646
        %v1679 = vmul.f32 %v1663, %v1647
        %v1680 = vmul.f32 %v1664, %v1648
        %v1681 = vmul.f32 %v1665, %v1649
        %v1682 = vmul.f32 %v1666, %v1650
        %v1683 = vmul.f32 %v1667, %v1651
        %v1684 = vmul.f32 %v1668, %v1652
        %v1685 = vmul.f32 %v1669, %v1653
        %v1686 = vmul.f32 %v1670, %v1654
        %v1687 = vmul.f32 %v1671, %v1655
        %v1688 = vmul.f32 %v1672, %v1656
        %vm1689 = vcmask 64512
        %v1690 = vsel %vm1689, %v1673, 0.0
        %v1691 = vsel %vm1689, %v1674, 0.0
        %v1692 = vadd.f32 %v1690, %v1691
        %v1693 = vsel %vm1689, %v1675, 0.0
        %v1694 = vadd.f32 %v1692, %v1693
        %v1695 = vsel %vm1689, %v1676, 0.0
        %v1696 = vadd.f32 %v1694, %v1695
        %v1697 = vsel %vm1689, %v1677, 0.0
        %v1698 = vadd.f32 %v1696, %v1697
        %v1699 = vsel %vm1689, %v1678, 0.0
        %v1700 = vadd.f32 %v1698, %v1699
        %v1701 = vsel %vm1689, %v1679, 0.0
        %v1702 = vadd.f32 %v1700, %v1701
        %v1703 = vsel %vm1689, %v1680, 0.0
        %v1704 = vadd.f32 %v1702, %v1703
        %v1705 = vsel %vm1689, %v1681, 0.0
        %v1706 = vadd.f32 %v1704, %v1705
        %v1707 = vsel %vm1689, %v1682, 0.0
        %v1708 = vadd.f32 %v1706, %v1707
        %v1709 = vsel %vm1689, %v1683, 0.0
        %v1710 = vadd.f32 %v1708, %v1709
        %v1711 = vsel %vm1689, %v1684, 0.0
        %v1712 = vadd.f32 %v1710, %v1711
        %v1713 = vsel %vm1689, %v1685, 0.0
        %v1714 = vadd.f32 %v1712, %v1713
        %v1715 = vsel %vm1689, %v1686, 0.0
        %v1716 = vadd.f32 %v1714, %v1715
        %v1717 = vsel %vm1689, %v1687, 0.0
        %v1718 = vadd.f32 %v1716, %v1717
        %v1719 = vsel %vm1689, %v1688, 0.0
        %v1720 = vadd.f32 %v1718, %v1719
        %v1721 = vrot.slane %v1720, 4
        %v1722 = vadd.f32 %v1720, %v1721
        %v1723 = vrot.slane %v1722, 2
        %v1724 = vadd.f32 %v1722, %v1723
        %v1725 = vrot.slane %v1724, 1
        %v1726 = vadd.f32 %v1724, %v1725
        %v1727 = vld [vmem:[%s8] sm:$0x1]
        %v1728 = vadd.f32 %v1726, %v1727
        %v1729 = vmax.f32 %v1728, 0.0
        %v1730 = vld [vmem:[%s9] sm:$0xff]
        %v1731 = vld [vmem:[%s9 + $0x8] sm:$0xff]
        %v1732 = vld [vmem:[%s9 + $0x10] sm:$0xff]
        %v1733 = vld [vmem:[%s9 + $0x18] sm:$0xff]
        %v1734 = vld [vmem:[%s9 + $0x20] sm:$0xff]
        %v1735 = vld [vmem:[%s9 + $0x28] sm:$0xff]
        %v1736 = vld [vmem:[%s9 + $0x30] sm:$0xff]
        %v1737 = vld [vmem:[%s9 + $0x38] sm:$0xff]
        %v1738 = vld [vmem:[%s9 + $0x40] sm:$0xff]
        %v1739 = vld [vmem:[%s9 + $0x48] sm:$0xff]
        %v1740 = vld [vmem:[%s9 + $0x50] sm:$0xff]
        %v1741 = vld [vmem:[%s9 + $0x58] sm:$0xff]
        %v1742 = vld [vmem:[%s9 + $0x60] sm:$0xff]
        %v1743 = vld [vmem:[%s9 + $0x68] sm:$0xff]
        %v1744 = vld [vmem:[%s9 + $0x70] sm:$0xff]
        %v1745 = vld [vmem:[%s9 + $0x78] sm:$0xff]
        %v1746 = vlaneseq
        %v1747 = vshrl.u32 %v1746, 7
        %v1748 = vsub.s32 0, %v1747
        %v1749 = vrot.slane %v1729, %v1748
        %v1750 = vmul.f32 %v1730, %v1749
        %v1751 = vmul.f32 %v1731, %v1749
        %v1752 = vmul.f32 %v1732, %v1749
        %v1753 = vmul.f32 %v1733, %v1749
        %v1754 = vmul.f32 %v1734, %v1749
        %v1755 = vmul.f32 %v1735, %v1749
        %v1756 = vmul.f32 %v1736, %v1749
        %v1757 = vmul.f32 %v1737, %v1749
        %v1758 = vmul.f32 %v1738, %v1749
        %v1759 = vmul.f32 %v1739, %v1749
        %v1760 = vmul.f32 %v1740, %v1749
        %v1761 = vmul.f32 %v1741, %v1749
        %v1762 = vmul.f32 %v1742, %v1749
        %v1763 = vmul.f32 %v1743, %v1749
        %v1764 = vmul.f32 %v1744, %v1749
        %v1765 = vmul.f32 %v1745, %v1749
        %v1766 = vsel %vm1689, %v1750, 0.0
        %1767 = vadd.xlane.f32.xlu0 %v1766
        %v1768 = vpop.xlane.xlu0 %1767
        %v1769 = vsel %vm1689, %v1751, 0.0
        %1770 = vadd.xlane.f32.xlu0 %v1769
        %v1771 = vpop.xlane.xlu0 %1770
        %v1772 = vsel %vm1689, %v1752, 0.0
        %1773 = vadd.xlane.f32.xlu0 %v1772
        %v1774 = vpop.xlane.xlu0 %1773
        %v1775 = vsel %vm1689, %v1753, 0.0
        %1776 = vadd.xlane.f32.xlu0 %v1775
        %v1777 = vpop.xlane.xlu0 %1776
        %v1778 = vsel %vm1689, %v1754, 0.0
        %1779 = vadd.xlane.f32.xlu0 %v1778
        %v1780 = vpop.xlane.xlu0 %1779
        %v1781 = vsel %vm1689, %v1755, 0.0
        %1782 = vadd.xlane.f32.xlu0 %v1781
        %v1783 = vpop.xlane.xlu0 %1782
        %v1784 = vsel %vm1689, %v1756, 0.0
        %1785 = vadd.xlane.f32.xlu0 %v1784
        %v1786 = vpop.xlane.xlu0 %1785
        %v1787 = vsel %vm1689, %v1757, 0.0
        %1788 = vadd.xlane.f32.xlu0 %v1787
        %v1789 = vpop.xlane.xlu0 %1788
        %v1790 = vsel %vm1689, %v1758, 0.0
        %1791 = vadd.xlane.f32.xlu0 %v1790
        %v1792 = vpop.xlane.xlu0 %1791
        %v1793 = vsel %vm1689, %v1759, 0.0
        %1794 = vadd.xlane.f32.xlu0 %v1793
        %v1795 = vpop.xlane.xlu0 %1794
        %v1796 = vsel %vm1689, %v1760, 0.0
        %1797 = vadd.xlane.f32.xlu0 %v1796
        %v1798 = vpop.xlane.xlu0 %1797
        %v1799 = vsel %vm1689, %v1761, 0.0
        %1800 = vadd.xlane.f32.xlu0 %v1799
        %v1801 = vpop.xlane.xlu0 %1800
        %v1802 = vsel %vm1689, %v1762, 0.0
        %1803 = vadd.xlane.f32.xlu0 %v1802
        %v1804 = vpop.xlane.xlu0 %1803
        %v1805 = vsel %vm1689, %v1763, 0.0
        %1806 = vadd.xlane.f32.xlu0 %v1805
        %v1807 = vpop.xlane.xlu0 %1806
        %v1808 = vsel %vm1689, %v1764, 0.0
        %1809 = vadd.xlane.f32.xlu0 %v1808
        %v1810 = vpop.xlane.xlu0 %1809
        %v1811 = vsel %vm1689, %v1765, 0.0
        %1812 = vadd.xlane.f32.xlu0 %v1811
        %v1813 = vpop.xlane.xlu0 %1812
        %v1814 = vld [vmem:[%s10] sm:$0xff]
        %v1815 = vld [vmem:[%s10 + $0x8] sm:$0xff]
        %v1816 = vld [vmem:[%s10 + $0x10] sm:$0xff]
        %v1817 = vld [vmem:[%s10 + $0x18] sm:$0xff]
        %v1818 = vld [vmem:[%s10 + $0x20] sm:$0xff]
        %v1819 = vld [vmem:[%s10 + $0x28] sm:$0xff]
        %v1820 = vld [vmem:[%s10 + $0x30] sm:$0xff]
        %v1821 = vld [vmem:[%s10 + $0x38] sm:$0xff]
        %v1822 = vld [vmem:[%s10 + $0x40] sm:$0xff]
        %v1823 = vld [vmem:[%s10 + $0x48] sm:$0xff]
        %v1824 = vld [vmem:[%s10 + $0x50] sm:$0xff]
        %v1825 = vld [vmem:[%s10 + $0x58] sm:$0xff]
        %v1826 = vld [vmem:[%s10 + $0x60] sm:$0xff]
        %v1827 = vld [vmem:[%s10 + $0x68] sm:$0xff]
        %v1828 = vld [vmem:[%s10 + $0x70] sm:$0xff]
        %v1829 = vld [vmem:[%s10 + $0x78] sm:$0xff]
        %v1830 = vadd.f32 %v1768, %v1814
        %v1831 = vadd.f32 %v1771, %v1815
        %v1832 = vadd.f32 %v1774, %v1816
        %v1833 = vadd.f32 %v1777, %v1817
        %v1834 = vadd.f32 %v1780, %v1818
        %v1835 = vadd.f32 %v1783, %v1819
        %v1836 = vadd.f32 %v1786, %v1820
        %v1837 = vadd.f32 %v1789, %v1821
        %v1838 = vadd.f32 %v1792, %v1822
        %v1839 = vadd.f32 %v1795, %v1823
        %v1840 = vadd.f32 %v1798, %v1824
        %v1841 = vadd.f32 %v1801, %v1825
        %v1842 = vadd.f32 %v1804, %v1826
        %v1843 = vadd.f32 %v1807, %v1827
        %v1844 = vadd.f32 %v1810, %v1828
        %v1845 = vadd.f32 %v1813, %v1829
        %v1846 = vxor.u32 %v1830, 2147483648
        %v1847 = vxor.u32 %v1831, 2147483648
        %v1848 = vxor.u32 %v1832, 2147483648
        %v1849 = vxor.u32 %v1833, 2147483648
        %v1850 = vxor.u32 %v1834, 2147483648
        %v1851 = vxor.u32 %v1835, 2147483648
        %v1852 = vxor.u32 %v1836, 2147483648
        %v1853 = vxor.u32 %v1837, 2147483648
        %v1854 = vxor.u32 %v1838, 2147483648
        %v1855 = vxor.u32 %v1839, 2147483648
        %v1856 = vxor.u32 %v1840, 2147483648
        %v1857 = vxor.u32 %v1841, 2147483648
        %v1858 = vxor.u32 %v1842, 2147483648
        %v1859 = vxor.u32 %v1843, 2147483648
        %v1860 = vxor.u32 %v1844, 2147483648
        %v1861 = vxor.u32 %v1845, 2147483648
        %v1862 = vmul.f32 %v1846, 1.442695
        %v1863 = vpow.pop %v1862
        %v1864 = vmul.f32 %v1847, 1.442695
        %v1865 = vpow.pop %v1864
        %v1866 = vmul.f32 %v1848, 1.442695
        %v1867 = vpow.pop %v1866
        %v1868 = vmul.f32 %v1849, 1.442695
        %v1869 = vpow.pop %v1868
        %v1870 = vmul.f32 %v1850, 1.442695
        %v1871 = vpow.pop %v1870
        %v1872 = vmul.f32 %v1851, 1.442695
        %v1873 = vpow.pop %v1872
        %v1874 = vmul.f32 %v1852, 1.442695
        %v1875 = vpow.pop %v1874
        %v1876 = vmul.f32 %v1853, 1.442695
        %v1877 = vpow.pop %v1876
        %v1878 = vmul.f32 %v1854, 1.442695
        %v1879 = vpow.pop %v1878
        %v1880 = vmul.f32 %v1855, 1.442695
        %v1881 = vpow.pop %v1880
        %v1882 = vmul.f32 %v1856, 1.442695
        %v1883 = vpow.pop %v1882
        %v1884 = vmul.f32 %v1857, 1.442695
        %v1885 = vpow.pop %v1884
        %v1886 = vmul.f32 %v1858, 1.442695
        %v1887 = vpow.pop %v1886
        %v1888 = vmul.f32 %v1859, 1.442695
        %v1889 = vpow.pop %v1888
        %v1890 = vmul.f32 %v1860, 1.442695
        %v1891 = vpow.pop %v1890
        %v1892 = vmul.f32 %v1861, 1.442695
        %v1893 = vpow.pop %v1892
        %v1894 = vadd.f32 %v1863, 1.0
        %v1895 = vadd.f32 %v1865, 1.0
        %v1896 = vadd.f32 %v1867, 1.0
        %v1897 = vadd.f32 %v1869, 1.0
        %v1898 = vadd.f32 %v1871, 1.0
        %v1899 = vadd.f32 %v1873, 1.0
        %v1900 = vadd.f32 %v1875, 1.0
        %v1901 = vadd.f32 %v1877, 1.0
        %v1902 = vadd.f32 %v1879, 1.0
        %v1903 = vadd.f32 %v1881, 1.0
        %v1904 = vadd.f32 %v1883, 1.0
        %v1905 = vadd.f32 %v1885, 1.0
        %v1906 = vadd.f32 %v1887, 1.0
        %v1907 = vadd.f32 %v1889, 1.0
        %v1908 = vadd.f32 %v1891, 1.0
        %v1909 = vadd.f32 %v1893, 1.0
        %v1910 = vrcp.pop %v1894
        %v1911 = vmul.f32 1.0, %v1910
        %v1912 = vrcp.pop %v1895
        %v1913 = vmul.f32 1.0, %v1912
        %v1914 = vrcp.pop %v1896
        %v1915 = vmul.f32 1.0, %v1914
        %v1916 = vrcp.pop %v1897
        %v1917 = vmul.f32 1.0, %v1916
        %v1918 = vrcp.pop %v1898
        %v1919 = vmul.f32 1.0, %v1918
        %v1920 = vrcp.pop %v1899
        %v1921 = vmul.f32 1.0, %v1920
        %v1922 = vrcp.pop %v1900
        %v1923 = vmul.f32 1.0, %v1922
        %v1924 = vrcp.pop %v1901
        %v1925 = vmul.f32 1.0, %v1924
        %v1926 = vrcp.pop %v1902
        %v1927 = vmul.f32 1.0, %v1926
        %v1928 = vrcp.pop %v1903
        %v1929 = vmul.f32 1.0, %v1928
        %v1930 = vrcp.pop %v1904
        %v1931 = vmul.f32 1.0, %v1930
        %v1932 = vrcp.pop %v1905
        %v1933 = vmul.f32 1.0, %v1932
        %v1934 = vrcp.pop %v1906
        %v1935 = vmul.f32 1.0, %v1934
        %v1936 = vrcp.pop %v1907
        %v1937 = vmul.f32 1.0, %v1936
        %v1938 = vrcp.pop %v1908
        %v1939 = vmul.f32 1.0, %v1938
        %v1940 = vrcp.pop %v1909
        %v1941 = vmul.f32 1.0, %v1940
        %1943 = vset.pattern.permute.xlu0 0
        %1944 = vperm.xlu0 %1943, %v1911
        %v1945 = vpop.permute.xlu0 %1944
        %1948 = vset.pattern.permute.xlu0 0
        %1949 = vperm.xlu0 %1948, %v1913
        %v1950 = vpop.permute.xlu0 %1949
        %1953 = vset.pattern.permute.xlu0 0
        %1954 = vperm.xlu0 %1953, %v1915
        %v1955 = vpop.permute.xlu0 %1954
        %1958 = vset.pattern.permute.xlu0 0
        %1959 = vperm.xlu0 %1958, %v1917
        %v1960 = vpop.permute.xlu0 %1959
        %1963 = vset.pattern.permute.xlu0 0
        %1964 = vperm.xlu0 %1963, %v1919
        %v1965 = vpop.permute.xlu0 %1964
        %1968 = vset.pattern.permute.xlu0 0
        %1969 = vperm.xlu0 %1968, %v1921
        %v1970 = vpop.permute.xlu0 %1969
        %1973 = vset.pattern.permute.xlu0 0
        %1974 = vperm.xlu0 %1973, %v1923
        %v1975 = vpop.permute.xlu0 %1974
        %1978 = vset.pattern.permute.xlu0 0
        %1979 = vperm.xlu0 %1978, %v1925
        %v1980 = vpop.permute.xlu0 %1979
        %1983 = vset.pattern.permute.xlu0 0
        %1984 = vperm.xlu0 %1983, %v1927
        %v1985 = vpop.permute.xlu0 %1984
        %1988 = vset.pattern.permute.xlu0 0
        %1989 = vperm.xlu0 %1988, %v1929
        %v1990 = vpop.permute.xlu0 %1989
        %1993 = vset.pattern.permute.xlu0 0
        %1994 = vperm.xlu0 %1993, %v1931
        %v1995 = vpop.permute.xlu0 %1994
        %1998 = vset.pattern.permute.xlu0 0
        %1999 = vperm.xlu0 %1998, %v1933
        %v2000 = vpop.permute.xlu0 %1999
        %2003 = vset.pattern.permute.xlu0 0
        %2004 = vperm.xlu0 %2003, %v1935
        %v2005 = vpop.permute.xlu0 %2004
        %2008 = vset.pattern.permute.xlu0 0
        %2009 = vperm.xlu0 %2008, %v1937
        %v2010 = vpop.permute.xlu0 %2009
        %2013 = vset.pattern.permute.xlu0 0
        %2014 = vperm.xlu0 %2013, %v1939
        %v2015 = vpop.permute.xlu0 %2014
        %2018 = vset.pattern.permute.xlu0 0
        %2019 = vperm.xlu0 %2018, %v1941
        %v2020 = vpop.permute.xlu0 %2019
        %v2022 = vmul.f32 %v1546, %v1945
        %v2023 = vmul.f32 %v1549, %v1950
        %v2024 = vmul.f32 %v1554, %v1955
        %v2025 = vmul.f32 %v1557, %v1960
        %v2026 = vmul.f32 %v1562, %v1965
        %v2027 = vmul.f32 %v1565, %v1970
        %v2028 = vmul.f32 %v1570, %v1975
        %v2029 = vmul.f32 %v1573, %v1980
        %v2030 = vmul.f32 %v1578, %v1985
        %v2031 = vmul.f32 %v1581, %v1990
        %v2032 = vmul.f32 %v1586, %v1995
        %v2033 = vmul.f32 %v1589, %v2000
        %v2034 = vmul.f32 %v1594, %v2005
        %v2035 = vmul.f32 %v1597, %v2010
        %v2036 = vmul.f32 %v1602, %v2015
        %v2037 = vmul.f32 %v1605, %v2020
        %v2038 = vld [vmem:[%s5] sm:$0xf]
        %v2039 = vld [vmem:[%s5 + $0x4] sm:$0xf]
        %v2040 = vld [vmem:[%s5 + $0x8] sm:$0xf]
        %v2041 = vld [vmem:[%s5 + $0xc] sm:$0xf]
        %v2042 = vld [vmem:[%s5 + $0x10] sm:$0xf]
        %v2043 = vld [vmem:[%s5 + $0x14] sm:$0xf]
        %v2044 = vld [vmem:[%s5 + $0x18] sm:$0xf]
        %v2045 = vld [vmem:[%s5 + $0x1c] sm:$0xf]
        %v2046 = vld [vmem:[%s5 + $0x20] sm:$0xf]
        %v2047 = vld [vmem:[%s5 + $0x24] sm:$0xf]
        %v2048 = vld [vmem:[%s5 + $0x28] sm:$0xf]
        %v2049 = vld [vmem:[%s5 + $0x2c] sm:$0xf]
        %v2050 = vld [vmem:[%s5 + $0x30] sm:$0xf]
        %v2051 = vld [vmem:[%s5 + $0x34] sm:$0xf]
        %v2052 = vld [vmem:[%s5 + $0x38] sm:$0xf]
        %v2053 = vld [vmem:[%s5 + $0x3c] sm:$0xf]
        %v2054 = vld [vmem:[%s6] sm:$0xff]
        %v2055 = vld [vmem:[%s6 + $0x8] sm:$0xff]
        %v2056 = vld [vmem:[%s6 + $0x10] sm:$0xff]
        %v2057 = vld [vmem:[%s6 + $0x18] sm:$0xff]
        %v2058 = vld [vmem:[%s6 + $0x20] sm:$0xff]
        %v2059 = vld [vmem:[%s6 + $0x28] sm:$0xff]
        %v2060 = vld [vmem:[%s6 + $0x30] sm:$0xff]
        %v2061 = vld [vmem:[%s6 + $0x38] sm:$0xff]
        %v2062 = vld [vmem:[%s6 + $0x40] sm:$0xff]
        %v2063 = vld [vmem:[%s6 + $0x48] sm:$0xff]
        %v2064 = vld [vmem:[%s6 + $0x50] sm:$0xff]
        %v2065 = vld [vmem:[%s6 + $0x58] sm:$0xff]
        %v2066 = vld [vmem:[%s6 + $0x60] sm:$0xff]
        %v2067 = vld [vmem:[%s6 + $0x68] sm:$0xff]
        %v2068 = vld [vmem:[%s6 + $0x70] sm:$0xff]
        %v2069 = vld [vmem:[%s6 + $0x78] sm:$0xff]
        %2071 = vset.pattern.permute.xlu0 0
        %2072 = vperm.xlu0 %2071, %v2054
        %v2073 = vpop.permute.xlu0 %2072
        %2076 = vset.pattern.permute.xlu0 0
        %2077 = vperm.xlu0 %2076, %v2055
        %v2078 = vpop.permute.xlu0 %2077
        %2081 = vset.pattern.permute.xlu0 0
        %2082 = vperm.xlu0 %2081, %v2056
        %v2083 = vpop.permute.xlu0 %2082
        %2086 = vset.pattern.permute.xlu0 0
        %2087 = vperm.xlu0 %2086, %v2057
        %v2088 = vpop.permute.xlu0 %2087
        %2091 = vset.pattern.permute.xlu0 0
        %2092 = vperm.xlu0 %2091, %v2058
        %v2093 = vpop.permute.xlu0 %2092
        %2096 = vset.pattern.permute.xlu0 0
        %2097 = vperm.xlu0 %2096, %v2059
        %v2098 = vpop.permute.xlu0 %2097
        %2101 = vset.pattern.permute.xlu0 0
        %2102 = vperm.xlu0 %2101, %v2060
        %v2103 = vpop.permute.xlu0 %2102
        %2106 = vset.pattern.permute.xlu0 0
        %2107 = vperm.xlu0 %2106, %v2061
        %v2108 = vpop.permute.xlu0 %2107
        %2111 = vset.pattern.permute.xlu0 0
        %2112 = vperm.xlu0 %2111, %v2062
        %v2113 = vpop.permute.xlu0 %2112
        %2116 = vset.pattern.permute.xlu0 0
        %2117 = vperm.xlu0 %2116, %v2063
        %v2118 = vpop.permute.xlu0 %2117
        %2121 = vset.pattern.permute.xlu0 0
        %2122 = vperm.xlu0 %2121, %v2064
        %v2123 = vpop.permute.xlu0 %2122
        %2126 = vset.pattern.permute.xlu0 0
        %2127 = vperm.xlu0 %2126, %v2065
        %v2128 = vpop.permute.xlu0 %2127
        %2131 = vset.pattern.permute.xlu0 0
        %2132 = vperm.xlu0 %2131, %v2066
        %v2133 = vpop.permute.xlu0 %2132
        %2136 = vset.pattern.permute.xlu0 0
        %2137 = vperm.xlu0 %2136, %v2067
        %v2138 = vpop.permute.xlu0 %2137
        %2141 = vset.pattern.permute.xlu0 0
        %2142 = vperm.xlu0 %2141, %v2068
        %v2143 = vpop.permute.xlu0 %2142
        %2146 = vset.pattern.permute.xlu0 0
        %2147 = vperm.xlu0 %2146, %v2069
        %v2148 = vpop.permute.xlu0 %2147
        %v2166 = vunpack.c.l.b16 %v2038
        %v2167 = vunpack.c.l.b16 %v2039
        %v2168 = vunpack.c.l.b16 %v2040
        %v2169 = vunpack.c.l.b16 %v2041
        %v2170 = vunpack.c.l.b16 %v2042
        %v2171 = vunpack.c.l.b16 %v2043
        %v2172 = vunpack.c.l.b16 %v2044
        %v2173 = vunpack.c.l.b16 %v2045
        %v2174 = vunpack.c.l.b16 %v2046
        %v2175 = vunpack.c.l.b16 %v2047
        %v2176 = vunpack.c.l.b16 %v2048
        %v2177 = vunpack.c.l.b16 %v2049
        %v2178 = vunpack.c.l.b16 %v2050
        %v2179 = vunpack.c.l.b16 %v2051
        %v2180 = vunpack.c.l.b16 %v2052
        %v2181 = vunpack.c.l.b16 %v2053
        %v2182 = vpack.c.b16 %v2167, %v2166
        %v2183 = vpack.c.b16 %v2169, %v2168
        %v2184 = vpack.c.b16 %v2171, %v2170
        %v2185 = vpack.c.b16 %v2173, %v2172
        %v2186 = vpack.c.b16 %v2175, %v2174
        %v2187 = vpack.c.b16 %v2177, %v2176
        %v2188 = vpack.c.b16 %v2179, %v2178
        %v2189 = vpack.c.b16 %v2181, %v2180
        %v2191 = vsel %vm740, %v2182, 0
        %v2194 = vsel %vm740, %v2183, 0
        %v2197 = vsel %vm740, %v2184, 0
        %v2200 = vsel %vm740, %v2185, 0
        %v2203 = vsel %vm740, %v2186, 0
        %v2206 = vsel %vm740, %v2187, 0
        %v2209 = vsel %vm740, %v2188, 0
        %v2212 = vsel %vm740, %v2189, 0
        %2214 = vmatprep.subr.bf16.mxu0 0
        %2215 = vmatpush1.bf16.msra.mxu0 %v422
        %2216 = vmatprep.subr.bf16.mxu0 0
        %2217 = vmatpush1.bf16.msra.mxu0 %v423
        %2218 = vmatprep.subr.bf16.mxu0 0
        %2219 = vmatpush1.bf16.msra.mxu0 %v424
        %2220 = vmatprep.subr.bf16.mxu0 0
        %2221 = vmatpush1.bf16.msra.mxu0 %v425
        %2222 = vmatprep.subr.bf16.mxu0 0
        %2223 = vmatpush1.bf16.msra.mxu0 0
        %2224 = vmatprep.subr.bf16.mxu0 0
        %2225 = vmatpush1.bf16.msra.mxu0 0
        %2226 = vmatprep.subr.bf16.mxu0 0
        %2227 = vmatpush1.bf16.msra.mxu0 0
        %2228 = vmatprep.subr.bf16.mxu0 0
        %2229 = vmatpush1.bf16.msra.mxu0 0
        %2230 = vmatprep.subr.bf16.mxu0 0
        %2231 = vmatpush1.bf16.msra.mxu0 0
        %2232 = vmatprep.subr.bf16.mxu0 0
        %2233 = vmatpush1.bf16.msra.mxu0 0
        %2234 = vmatprep.subr.bf16.mxu0 0
        %2235 = vmatpush1.bf16.msra.mxu0 0
        %2236 = vmatprep.subr.bf16.mxu0 0
        %2237 = vmatpush1.bf16.msra.mxu0 0
        %2238 = vmatprep.subr.bf16.mxu0 0
        %2239 = vmatpush1.bf16.msra.mxu0 0
        %2240 = vmatprep.subr.bf16.mxu0 0
        %2241 = vmatpush1.bf16.msra.mxu0 0
        %2242 = vmatprep.subr.bf16.mxu0 0
        %2243 = vmatpush1.bf16.msra.mxu0 0
        %2244 = vmatprep.subr.bf16.mxu0 0
        %2245 = vmatpush1.bf16.msra.mxu0 0
        %2246 = vmatprep.mubr.bf16.mxu0 0
        %2247 = vmatmul.mubr.bf16.gmra.mrb[0].mxu0 %v2191
        %v2248 = vpop.f32.mrb[0].mxu0
        %v2249 = vadd.f32 %v2073, %v2248
        %v2250 = vpop.f32.mrb[0].mxu0
        %v2251 = vpop.f32.mrb[0].mxu0
        %v2252 = vadd.f32 %v2078, %v2251
        %v2253 = vpop.f32.mrb[0].mxu0
        %2254 = vmatprep.mubr.bf16.mxu0 0
        %2255 = vmatmul.mubr.bf16.gmra.mrb[0].mxu0 %v2194
        %v2256 = vpop.f32.mrb[0].mxu0
        %v2257 = vadd.f32 %v2083, %v2256
        %v2258 = vpop.f32.mrb[0].mxu0
        %v2259 = vpop.f32.mrb[0].mxu0
        %v2260 = vadd.f32 %v2088, %v2259
        %v2261 = vpop.f32.mrb[0].mxu0
        %2262 = vmatprep.mubr.bf16.mxu0 0
        %2263 = vmatmul.mubr.bf16.gmra.mrb[0].mxu0 %v2197
        %v2264 = vpop.f32.mrb[0].mxu0
        %v2265 = vadd.f32 %v2093, %v2264
        %v2266 = vpop.f32.mrb[0].mxu0
        %v2267 = vpop.f32.mrb[0].mxu0
        %v2268 = vadd.f32 %v2098, %v2267
        %v2269 = vpop.f32.mrb[0].mxu0
        %2270 = vmatprep.mubr.bf16.mxu0 0
        %2271 = vmatmul.mubr.bf16.gmra.mrb[0].mxu0 %v2200
        %v2272 = vpop.f32.mrb[0].mxu0
        %v2273 = vadd.f32 %v2103, %v2272
        %v2274 = vpop.f32.mrb[0].mxu0
        %v2275 = vpop.f32.mrb[0].mxu0
        %v2276 = vadd.f32 %v2108, %v2275
        %v2277 = vpop.f32.mrb[0].mxu0
        %2278 = vmatprep.mubr.bf16.mxu0 0
        %2279 = vmatmul.mubr.bf16.gmra.mrb[0].mxu0 %v2203
        %v2280 = vpop.f32.mrb[0].mxu0
        %v2281 = vadd.f32 %v2113, %v2280
        %v2282 = vpop.f32.mrb[0].mxu0
        %v2283 = vpop.f32.mrb[0].mxu0
        %v2284 = vadd.f32 %v2118, %v2283
        %v2285 = vpop.f32.mrb[0].mxu0
        %2286 = vmatprep.mubr.bf16.mxu0 0
        %2287 = vmatmul.mubr.bf16.gmra.mrb[0].mxu0 %v2206
        %v2288 = vpop.f32.mrb[0].mxu0
        %v2289 = vadd.f32 %v2123, %v2288
        %v2290 = vpop.f32.mrb[0].mxu0
        %v2291 = vpop.f32.mrb[0].mxu0
        %v2292 = vadd.f32 %v2128, %v2291
        %v2293 = vpop.f32.mrb[0].mxu0
        %2294 = vmatprep.mubr.bf16.mxu0 0
        %2295 = vmatmul.mubr.bf16.gmra.mrb[0].mxu0 %v2209
        %v2296 = vpop.f32.mrb[0].mxu0
        %v2297 = vadd.f32 %v2133, %v2296
        %v2298 = vpop.f32.mrb[0].mxu0
        %v2299 = vpop.f32.mrb[0].mxu0
        %v2300 = vadd.f32 %v2138, %v2299
        %v2301 = vpop.f32.mrb[0].mxu0
        %2302 = vmatprep.mubr.bf16.mxu0 0
        %2303 = vmatmul.mubr.bf16.gmra.mrb[0].mxu0 %v2212
        %v2304 = vpop.f32.mrb[0].mxu0
        %v2305 = vadd.f32 %v2143, %v2304
        %v2306 = vpop.f32.mrb[0].mxu0
        %v2307 = vpop.f32.mrb[0].mxu0
        %v2308 = vadd.f32 %v2148, %v2307
        %v2309 = vpop.f32.mrb[0].mxu0
        %2310 = vdwg.mxu0
        %v2311 = vadd.f32 %v2022, %v2249
        %v2312 = vadd.f32 %v2023, %v2252
        %v2313 = vadd.f32 %v2024, %v2257
        %v2314 = vadd.f32 %v2025, %v2260
        %v2315 = vadd.f32 %v2026, %v2265
        %v2316 = vadd.f32 %v2027, %v2268
        %v2317 = vadd.f32 %v2028, %v2273
        %v2318 = vadd.f32 %v2029, %v2276
        %v2319 = vadd.f32 %v2030, %v2281
        %v2320 = vadd.f32 %v2031, %v2284
        %v2321 = vadd.f32 %v2032, %v2289
        %v2322 = vadd.f32 %v2033, %v2292
        %v2323 = vadd.f32 %v2034, %v2297
        %v2324 = vadd.f32 %v2035, %v2300
        %v2325 = vadd.f32 %v2036, %v2305
        %v2326 = vadd.f32 %v2037, %v2308
        %v2327 = vmax.f32 %v2311, 0.0
        %v2328 = vmax.f32 %v2312, 0.0
        %v2329 = vmax.f32 %v2313, 0.0
        %v2330 = vmax.f32 %v2314, 0.0
        %v2331 = vmax.f32 %v2315, 0.0
        %v2332 = vmax.f32 %v2316, 0.0
        %v2333 = vmax.f32 %v2317, 0.0
        %v2334 = vmax.f32 %v2318, 0.0
        %v2335 = vmax.f32 %v2319, 0.0
        %v2336 = vmax.f32 %v2320, 0.0
        %v2337 = vmax.f32 %v2321, 0.0
        %v2338 = vmax.f32 %v2322, 0.0
        %v2339 = vmax.f32 %v2323, 0.0
        %v2340 = vmax.f32 %v2324, 0.0
        %v2341 = vmax.f32 %v2325, 0.0
        %v2342 = vmax.f32 %v2326, 0.0
        %2343 = vst [vmem:[%s379] sm:$0xff] %v2327
        %2344 = vst [vmem:[%s379 + $0x8] sm:$0xff] %v2328
        %2345 = vst [vmem:[%s379 + $0x10] sm:$0xff] %v2329
        %2346 = vst [vmem:[%s379 + $0x18] sm:$0xff] %v2330
        %2347 = vst [vmem:[%s379 + $0x20] sm:$0xff] %v2331
        %2348 = vst [vmem:[%s379 + $0x28] sm:$0xff] %v2332
        %2349 = vst [vmem:[%s379 + $0x30] sm:$0xff] %v2333
        %2350 = vst [vmem:[%s379 + $0x38] sm:$0xff] %v2334
        %2351 = vst [vmem:[%s379 + $0x40] sm:$0xff] %v2335
        %2352 = vst [vmem:[%s379 + $0x48] sm:$0xff] %v2336
        %2353 = vst [vmem:[%s379 + $0x50] sm:$0xff] %v2337
        %2354 = vst [vmem:[%s379 + $0x58] sm:$0xff] %v2338
        %2355 = vst [vmem:[%s379 + $0x60] sm:$0xff] %v2339
        %2356 = vst [vmem:[%s379 + $0x68] sm:$0xff] %v2340
        %2357 = vst [vmem:[%s379 + $0x70] sm:$0xff] %v2341
        %2358 = vst [vmem:[%s379 + $0x78] sm:$0xff] %v2342
        %s2359 = sand.u32 %s269, 1
        %s2360 = scalar_lea.sflag [#allocation5], %s2359
        %s2361 = sand.u32 %s269, 1
        %s2362 = smul.addr %s2361, 128
        %s2363 = scalar_lea.vmem [#allocation4], %s2362
        // Predicated region
        $region65: #{basic_block_1d.1} parent=63 // pred_check
          %p2364 = pneg %p279
        $region66: #{basic_block_1d.1} parent=63 // pred_check_branch
          %2366 = sbr.rel (%p2364) target = $region68
        $region67: #{basic_block_1d.1} parent=63 // pred_region
          %s2368 = ssub.s32 2048, 2048
          %2369 = vsyncadd %s2360, %s2368
          %s2370 = smul.addr %s25, 16
          %s2371 = smul.addr %s2370, 128
          %s2372 = scalar_lea.hbm %s11, %s2371
          %s2373 = sshll.u32 %s2363, 4
          %s2374 = int_to_ptr.vmem [resolvable:$true] %s2373
          %2379 = dma.vmem_to_hbm [thread:$0]  %s2374, 2048, %s2372, %s2360, 128, 128, 8
        $region68: #{basic_block_1d.1} parent=63 // pred_fallthru
          _
      $region64: #{basic_block_1d.1} parent=5 // pred_fallthru
        _
      %p2380 = scmp.le.s32.totalorder 2, %s20
      // Predicated region
      $region69: #{basic_block_1d.1} parent=5 // pred_check
        %p2381 = pneg %p2380
      $region70: #{basic_block_1d.1} parent=5 // pred_check_branch
        %2383 = sbr.rel (%p2381) target = $region72
      $region71: #{basic_block_1d.1} parent=5 // pred_region
        %s2384 = ssub.s32 %s20, 2
        // Predicated region
        $region73: #{basic_block_1d.1} parent=71 // pred_check
          %p2385 = pneg %p285
        $region74: #{basic_block_1d.1} parent=71 // pred_check_branch
          %2387 = sbr.rel (%p2385) target = $region76
        $region75: #{basic_block_1d.1} parent=71 // pred_region
          %s2388 = sand.u32 %s270, 1
          %s2389 = scalar_lea.sflag [#allocation5], %s2388
          %s2390 = sand.u32 %s270, 1
          %s2391 = smul.addr %s2390, 128
          %s2392 = scalar_lea.vmem [#allocation4], %s2391
          %2393 = dma.done %s2389, 2048
        $region76: #{basic_block_1d.1} parent=71 // pred_fallthru
          _
      $region72: #{basic_block_1d.1} parent=5 // pred_fallthru
        _
    $region6: #{basic_block_1d.1} parent=1 // loop_footer
      %s24 = sadd.s32 1, %s20
    $region7: #{basic_block_1d.1} parent=1 // loop_footer_branch
      %19 = sbr.rel target = $region3
    $region8: #{basic_block_1d.1} parent=1 // loop_exit
      _
    %2394 = vsyncpa [#allocation5], 1
    %s2395 = scalar_lea.sflag [#allocation5], 1
    %2396 = vsyncpa %s2395, 1

</llo_original>
